<compile_context>
chip_gen: v5e
topology: v5e:2x2
jax: 0.10.0
libtpu: 0.0.40
codegen_flags: <defaults>
</compile_context>

<pallas_src>
import functools

import jax
import jax.numpy as jnp
from jax import lax
from jax.experimental import pallas as pl
from jax.experimental.pallas import tpu as pltpu  # noqa: F401  (kept for TPU-specific tuning hooks)


# ----------------------------------------------------------------------------- kernel
def _attention_rnn_kernel(idx_ref, pbuf_ref, out_ref):
    """idx_ref : [T*Bp, 2] int32   col0 = fwd token row, col1 = bwd token row (+V offset)
       pbuf_ref: [8+4H+VP, 6H] f32 packed params:
           row 0            : bx   (folded r/z biases + b_in), cols [r_f|r_b|z_f|z_b|n_f|n_b]
           row 1            : bnh(0:2H) | wa(2H:4H) | fcb(4H:4H+8)
           rows 8   .. 8+2H : fcw [2H, 8] in cols 0:8
           rows 8+2H.. 8+4H : whb [2H, 6H] block hidden weights (fwd rows 0:H, bwd rows H:2H)
           rows 8+4H.. end  : proj [VP, 6H] = emb @ W_input (fwd rows 0:V, bwd rows V:2V)
       out_ref : [Bp, 8] f32 logits
    """
    f32 = jnp.float32
    Bp = out_ref.shape[0]
    TB = idx_ref.shape[0]
    T = TB // Bp
    H6 = pbuf_ref.shape[1]
    H = H6 // 6
    H2, H4 = 2 * H, 4 * H
    ROW_FCW, ROW_WHB, ROW_PROJ = 8, 8 + H2, 8 + H4
    VP = pbuf_ref.shape[0] - ROW_PROJ

    # ---- packed parameter slabs (small, aligned VMEM window loads)
    head = pbuf_ref[pl.ds(0, 8), :]                                  # [8, 6H]
    bx = head[0:1, :]                                                # [1, 6H]
    misc = head[1:2, :]                                              # [1, 6H]
    bnh = misc[:, 0:H2]                                              # [1, 2H]  (b_hn fwd|bwd)
    whb = pbuf_ref[pl.ds(ROW_WHB, H2), :].astype(jnp.bfloat16)       # [2H, 6H] hidden weights
    proj = pbuf_ref[pl.ds(ROW_PROJ, VP), :]                          # [VP, 6H] f32 emb@W_i table

    # ---- fused embedding gather + input projection for ALL timesteps / gates / dirs:
    #      one-hot rows select (and time-pair) the pre-projected table -> one MXU matmul.
    idx = idx_ref[...]                                               # [T*Bp, 2] int32
    lanes = lax.broadcasted_iota(jnp.int32, (TB, VP), 1)
    onehot = jnp.logical_or(lanes == idx[:, 0:1], lanes == idx[:, 1:2]).astype(f32)
    xp = jnp.dot(onehot, proj, preferred_element_type=f32) + bx      # [T*Bp, 6H]

    # ---- merged fwd/bwd GRU recurrence, fully unrolled.  Per step: ONE bf16 MXU push,
    #      ONE sigmoid on a lane-aligned [Bp, 4H] slab, ONE tanh on [Bp, 2H].
    #      PyTorch GRU: r=sig(..), z=sig(..), n=tanh(Wx+b_in + r*(Wh h + b_hn)),
    #                   h' = (1-z)*n + z*h
    h = jnp.zeros((Bp, H2), f32)                                     # [hf | hb]
    h_steps = []
    for i in range(T):
        gi = xp[i * Bp:(i + 1) * Bp, :]                              # fwd gates @ t=i, bwd @ t=T-1-i
        gh = jnp.dot(h.astype(jnp.bfloat16), whb,
                     preferred_element_type=f32)                     # [Bp, 6H]
        rz = jax.nn.sigmoid(gi[:, 0:H4] + gh[:, 0:H4])               # [Bp, 4H] = [r_f|r_b|z_f|z_b]
        r, z = rz[:, 0:H2], rz[:, H2:H4]
        n = jnp.tanh(gi[:, H4:H6] + r * (gh[:, H4:H6] + bnh))        # [Bp, 2H] = [n_f|n_b]
        h = (1.0 - z) * n + z * h
        h_steps.append(h)

    # ---- attention pooling epilogue (all f32, off the serial chain)
    wa = misc[:, H2:H4]                                              # [1, 2H]
    fcb = misc[:, H4:H4 + 8]                                         # [1, 8]
    fcw = pbuf_ref[pl.ds(ROW_FCW, H2), pl.ds(0, 8)]                  # [2H, 8]

    # regroup fused step states into time-aligned [hf_t | hb_t]
    hts = [jnp.concatenate([h_steps[t][:, 0:H], h_steps[T - 1 - t][:, H:H2]], axis=-1)
           for t in range(T)]                                        # T x [Bp, 2H]
    scores = [jnp.sum(jnp.tanh(ht) * wa, axis=-1, keepdims=True) for ht in hts]
    sc = jnp.concatenate(scores, axis=-1)                            # [Bp, T]
    sc = sc - jnp.max(sc, axis=-1, keepdims=True)
    e = jnp.exp(sc)
    a = e / jnp.sum(e, axis=-1, keepdims=True)                       # softmax over time
    r_pool = hts[0] * a[:, 0:1]
    for t in range(1, T):
        r_pool = r_pool + hts[t] * a[:, t:t + 1]
    r_pool = jnp.tanh(r_pool)                                        # [Bp, 2H]
    logits = jnp.dot(r_pool, fcw, preferred_element_type=f32) + fcb
    out_ref[...] = logits.astype(out_ref.dtype)


# ----------------------------------------------------------------------------- param packing (done once)
def pack_params(p, vocab_size):
    """Pack PyTorch-layout GRU/attention/FC params + frozen embedding into the single
    f32 parameter buffer consumed by the kernel.  Fused gate-column layout:
    [r_f | r_b | z_f | z_b | n_f | n_b]."""
    H = p["whh_f"].shape[1]
    V = vocab_size
    H2, H3, H4, H5, H6 = 2 * H, 3 * H, 4 * H, 5 * H, 6 * H
    VP = ((2 * V + 127) // 128) * 128                     # pad one-hot/table rows to lane group

    emb = p["emb"].astype(jnp.float32)
    proj_f = emb @ p["wih_f"].T                           # [V, 3H] cols r|z|n (f32, exact)
    proj_b = emb @ p["wih_b"].T
    wh_f = p["whh_f"].T                                   # [H, 3H]
    wh_b = p["whh_b"].T

    proj2 = jnp.zeros((VP, H6), jnp.float32)
    proj2 = proj2.at[0:V, 0:H].set(proj_f[:, 0:H])        # r_f
    proj2 = proj2.at[0:V, H2:H3].set(proj_f[:, H:H2])     # z_f
    proj2 = proj2.at[0:V, H4:H5].set(proj_f[:, H2:H3])    # n_f
    proj2 = proj2.at[V:2 * V, H:H2].set(proj_b[:, 0:H])   # r_b
    proj2 = proj2.at[V:2 * V, H3:H4].set(proj_b[:, H:H2])  # z_b
    proj2 = proj2.at[V:2 * V, H5:H6].set(proj_b[:, H2:H3])  # n_b

    whb = jnp.zeros((H2, H6), jnp.float32)                # block-structured hidden weights
    whb = whb.at[0:H, 0:H].set(wh_f[:, 0:H])
    whb = whb.at[0:H, H2:H3].set(wh_f[:, H:H2])
    whb = whb.at[0:H, H4:H5].set(wh_f[:, H2:H3])
    whb = whb.at[H:H2, H:H2].set(wh_b[:, 0:H])
    whb = whb.at[H:H2, H3:H4].set(wh_b[:, H:H2])
    whb = whb.at[H:H2, H5:H6].set(wh_b[:, H2:H3])

    bx = jnp.zeros((H6,), jnp.float32)                    # folded biases
    bx = bx.at[0:H].set(p["bih_f"][0:H] + p["bhh_f"][0:H])
    bx = bx.at[H:H2].set(p["bih_b"][0:H] + p["bhh_b"][0:H])
    bx = bx.at[H2:H3].set(p["bih_f"][H:H2] + p["bhh_f"][H:H2])
    bx = bx.at[H3:H4].set(p["bih_b"][H:H2] + p["bhh_b"][H:H2])
    bx = bx.at[H4:H5].set(p["bih_f"][H2:H3])
    bx = bx.at[H5:H6].set(p["bih_b"][H2:H3])

    bnh = jnp.concatenate([p["bhh_f"][H2:H3], p["bhh_b"][H2:H3]])   # [2H]  (b_hn fwd|bwd)
    wa = p["w"][:, 0].astype(jnp.float32)                            # [2H]  (fwd|bwd)
    fcw = p["fc_w"].T.astype(jnp.float32)                            # [2H, 8]
    fcb = p["fc_b"].astype(jnp.float32)                              # [8]

    nrows = 8 + 2 * H2 + VP
    pbuf = jnp.zeros((nrows, H6), jnp.float32)
    pbuf = pbuf.at[0, :].set(bx)
    pbuf = pbuf.at[1, 0:H2].set(bnh)
    pbuf = pbuf.at[1, H2:H4].set(wa)
    pbuf = pbuf.at[1, H4:H4 + 8].set(fcb)
    pbuf = pbuf.at[8:8 + H2, 0:8].set(fcw)
    pbuf = pbuf.at[8 + H2:8 + H4, :].set(whb)
    pbuf = pbuf.at[8 + H4:8 + H4 + VP, :].set(proj2)
    return pbuf


# ----------------------------------------------------------------------------- wrapper
@functools.partial(jax.jit, static_argnames=("vocab_size",))
def attention_rnn_forward(token_ids, pbuf, *, vocab_size):
    B, T = token_ids.shape
    Bp = max(8, ((B + 7) // 8) * 8)                       # pad batch to full sublane groups

    # tiny int32 index prep (pairs fwd time t with bwd time T-1-t for the one-hot matmul)
    ids = jnp.zeros((Bp, T), jnp.int32).at[:B, :].set(token_ids)
    ids_tm = ids.T                                        # [T, Bp] time-major
    idx_f = ids_tm.reshape(T * Bp, 1)
    idx_b = ids_tm[::-1].reshape(T * Bp, 1) + vocab_size
    idx = jnp.concatenate([idx_f, idx_b], axis=1).astype(jnp.int32)   # [T*Bp, 2]

    # TODO(synk): for large production batches add a batch grid axis with
    # dimension_semantics=("parallel",) so both v7x TensorCores are used.
    out = pl.pallas_call(
        _attention_rnn_kernel,
        out_shape=jax.ShapeDtypeStruct((Bp, 8), jnp.float32),
    )(idx, pbuf)
    return out[:B]


# ----------------------------------------------------------------------------- params / reference
def make_params(key, vocab_size, input_size, hidden_size):
    E, H = input_size, hidden_size
    ks = jax.random.split(key, 12)
    s = 1.0 / jnp.sqrt(jnp.float32(H))

    def u(k, shape):
        return jax.random.uniform(k, shape, jnp.float32, -s, s)

    return dict(
        emb=jax.random.normal(ks[0], (vocab_size, E), jnp.float32) * 0.1,
        wih_f=u(ks[1], (3 * H, E)), whh_f=u(ks[2], (3 * H, H)),
        bih_f=u(ks[3], (3 * H,)),   bhh_f=u(ks[4], (3 * H,)),
        wih_b=u(ks[5], (3 * H, E)), whh_b=u(ks[6], (3 * H, H)),
        bih_b=u(ks[7], (3 * H,)),   bhh_b=u(ks[8], (3 * H,)),
        w=jax.random.normal(ks[9], (2 * E, 1), jnp.float32),
        fc_w=u(ks[10], (8, 2 * H)), fc_b=u(ks[11], (8,)),
    )


def _gru_direction_ref(x_tbe, wih, whh, bih, bhh, reverse):
    H = whh.shape[1]

    def step(h, x_t):
        gi = x_t @ wih.T + bih
        gh = h @ whh.T + bhh
        r = jax.nn.sigmoid(gi[:, :H] + gh[:, :H])
        z = jax.nn.sigmoid(gi[:, H:2 * H] + gh[:, H:2 * H])
        n = jnp.tanh(gi[:, 2 * H:] + r * gh[:, 2 * H:])
        h_new = (1.0 - z) * n + z * h
        return h_new, h_new

    xs = x_tbe[::-1] if reverse else x_tbe
    h0 = jnp.zeros((x_tbe.shape[1], H), jnp.float32)
    _, hs = lax.scan(step, h0, xs)
    return hs[::-1] if reverse else hs


def reference_forward(token_ids, p):
    """Pure-JAX mirror of the PyTorch forward (GRU, num_layers=1, eval mode)."""
    x = jnp.take(p["emb"], token_ids, axis=0).astype(jnp.float32)   # [B, T, E]
    x_tbe = jnp.transpose(x, (1, 0, 2))
    hf = _gru_direction_ref(x_tbe, p["wih_f"], p["whh_f"], p["bih_f"], p["bhh_f"], False)
    hb = _gru_direction_ref(x_tbe, p["wih_b"], p["whh_b"], p["bih_b"], p["bhh_b"], True)
    out = jnp.concatenate([hf, hb], axis=-1)                        # [T, B, 2H]
    out = jnp.transpose(out, (1, 2, 0))                             # [B, 2H, T]
    m = jnp.tanh(out)
    a = jax.nn.softmax(jnp.einsum("d,bdt->bt", p["w"][:, 0], m), axis=1)
    r = jnp.tanh(jnp.einsum("bdt,bt->bd", out, a))                  # [B, 2H]
    return r @ p["fc_w"].T + p["fc_b"]


# ----------------------------------------------------------------------------- main
if __name__ == "__main__":
    # TODO(synk): num_layers > 1 stacking and the LSTM cell branch are not implemented
    # (single bidirectional GRU layer, matching cell='GRU', num_layers=1).
    # TODO(synk): the in-kernel one-hot gather assumes a small vocab (table fits VMEM);
    # a large production vocab would need a DMA-gather of the projected rows instead.
    vocab_size, input_size, hidden_size = 50, 32, 32   # hidden == input required by the module
    B, T = 4, 8

    key = jax.random.PRNGKey(0)
    pkey, dkey = jax.random.split(key)
    params = make_params(pkey, vocab_size, input_size, hidden_size)
    token_ids = jax.random.randint(dkey, (B, T), 0, vocab_size, dtype=jnp.int32)

    pbuf = pack_params(params, vocab_size)             # packed once, outside the hot path

    out = attention_rnn_forward(token_ids, pbuf, vocab_size=vocab_size)
    out = jax.block_until_ready(out)
    assert out.shape == (B, 8)

    with jax.default_matmul_precision("float32"):
        ref = reference_forward(token_ids, params)
    ref = jax.block_until_ready(ref)

    assert jnp.allclose(out, ref, atol=2e-2, rtol=2e-2), float(jnp.max(jnp.abs(out - ref)))
    print("KERNEL_OK")
</pallas_src>

<mosaic_0001>
module attributes {stable_mosaic.version = 11 : i64} {
  func.func @_attention_rnn_kernel(%arg0: memref<64x2xi32, #tpu.memory_space<vmem>>, %arg1: memref<264x192xf32, #tpu.memory_space<vmem>>, %arg2: memref<8x8xf32, #tpu.memory_space<vmem>>) attributes {dimension_semantics = [], scalar_prefetch = 0 : i64, scratch_operands = 0 : i64, tpu.core_type = #tpu.core_type<tc>} {
    %c0 = arith.constant 0 : index
    %c0_0 = arith.constant 0 : index
    %0 = vector.load %arg1[%c0, %c0_0] : memref<264x192xf32, #tpu.memory_space<vmem>>, vector<8x192xf32>
    %1 = vector.extract_strided_slice %0 {offsets = [0, 0], sizes = [1, 192], strides = [1, 1]} : vector<8x192xf32> to vector<1x192xf32>
    %2 = vector.extract_strided_slice %0 {offsets = [1, 0], sizes = [1, 192], strides = [1, 1]} : vector<8x192xf32> to vector<1x192xf32>
    %3 = vector.extract_strided_slice %2 {offsets = [0, 0], sizes = [1, 64], strides = [1, 1]} : vector<1x192xf32> to vector<1x64xf32>
    %c72 = arith.constant 72 : index
    %c0_1 = arith.constant 0 : index
    %4 = vector.load %arg1[%c72, %c0_1] : memref<264x192xf32, #tpu.memory_space<vmem>>, vector<64x192xf32>
    %5 = arith.truncf %4 : vector<64x192xf32> to vector<64x192xbf16>
    %c136 = arith.constant 136 : index
    %c0_2 = arith.constant 0 : index
    %6 = vector.load %arg1[%c136, %c0_2] : memref<264x192xf32, #tpu.memory_space<vmem>>, vector<128x192xf32>
    %c0_3 = arith.constant 0 : index
    %c0_4 = arith.constant 0 : index
    %7 = vector.load %arg0[%c0_3, %c0_4] : memref<64x2xi32, #tpu.memory_space<vmem>>, vector<64x2xi32>
    %8 = tpu.iota {dimensions = array<i32: 1>} : vector<64x128xi32>
    %9 = vector.extract_strided_slice %7 {offsets = [0, 0], sizes = [64, 1], strides = [1, 1]} : vector<64x2xi32> to vector<64x1xi32>
    %10 = vector.broadcast %9 : vector<64x1xi32> to vector<64x128xi32>
    %11 = arith.cmpi eq, %8, %10 : vector<64x128xi32>
    %12 = vector.extract_strided_slice %7 {offsets = [0, 1], sizes = [64, 1], strides = [1, 1]} : vector<64x2xi32> to vector<64x1xi32>
    %13 = vector.broadcast %12 : vector<64x1xi32> to vector<64x128xi32>
    %14 = arith.cmpi eq, %8, %13 : vector<64x128xi32>
    %15 = arith.ori %11, %14 : vector<64x128xi1>
    %16 = arith.extui %15 : vector<64x128xi1> to vector<64x128xi32>
    %17 = arith.sitofp %16 : vector<64x128xi32> to vector<64x128xf32>
    %cst = arith.constant dense<0.000000e+00> : vector<64x192xf32>
    %18 = tpu.matmul %17, %6, %cst {dimension_numbers = #tpu.dot_dimension_numbers<[1], [0], [0], [1], [0, 0, 1, 1], [], []>} : vector<64x128xf32>, vector<128x192xf32>, vector<64x192xf32> -> vector<64x192xf32>
    %19 = vector.broadcast %1 : vector<1x192xf32> to vector<64x192xf32>
    %20 = arith.addf %18, %19 : vector<64x192xf32>
    %cst_5 = arith.constant 0.000000e+00 : f32
    %21 = vector.broadcast %cst_5 : f32 to vector<8x64xf32>
    %22 = vector.extract_strided_slice %20 {offsets = [0, 0], sizes = [8, 192], strides = [1, 1]} : vector<64x192xf32> to vector<8x192xf32>
    %23 = arith.truncf %21 : vector<8x64xf32> to vector<8x64xbf16>
    %cst_6 = arith.constant dense<0.000000e+00> : vector<8x192xf32>
    %24 = tpu.matmul %23, %5, %cst_6 {dimension_numbers = #tpu.dot_dimension_numbers<[1], [0], [0], [1], [0, 0, 1, 1], [], []>} : vector<8x64xbf16>, vector<64x192xbf16>, vector<8x192xf32> -> vector<8x192xf32>
    %25 = vector.extract_strided_slice %22 {offsets = [0, 0], sizes = [8, 128], strides = [1, 1]} : vector<8x192xf32> to vector<8x128xf32>
    %26 = vector.extract_strided_slice %24 {offsets = [0, 0], sizes = [8, 128], strides = [1, 1]} : vector<8x192xf32> to vector<8x128xf32>
    %27 = arith.addf %25, %26 : vector<8x128xf32>
    %28 = arith.negf %27 : vector<8x128xf32>
    %29 = math.exp %28 : vector<8x128xf32>
    %cst_7 = arith.constant 1.000000e+00 : f32
    %30 = vector.broadcast %cst_7 : f32 to vector<8x128xf32>
    %31 = arith.addf %30, %29 : vector<8x128xf32>
    %32 = arith.divf %30, %31 : vector<8x128xf32>
    %33 = vector.extract_strided_slice %32 {offsets = [0, 0], sizes = [8, 64], strides = [1, 1]} : vector<8x128xf32> to vector<8x64xf32>
    %34 = vector.extract_strided_slice %32 {offsets = [0, 64], sizes = [8, 64], strides = [1, 1]} : vector<8x128xf32> to vector<8x64xf32>
    %35 = vector.extract_strided_slice %22 {offsets = [0, 128], sizes = [8, 64], strides = [1, 1]} : vector<8x192xf32> to vector<8x64xf32>
    %36 = vector.extract_strided_slice %24 {offsets = [0, 128], sizes = [8, 64], strides = [1, 1]} : vector<8x192xf32> to vector<8x64xf32>
    %37 = vector.broadcast %3 : vector<1x64xf32> to vector<8x64xf32>
    %38 = arith.addf %36, %37 : vector<8x64xf32>
    %39 = arith.mulf %33, %38 : vector<8x64xf32>
    %40 = arith.addf %35, %39 : vector<8x64xf32>
    %41 = math.tanh %40 : vector<8x64xf32>
    %cst_8 = arith.constant 1.000000e+00 : f32
    %42 = vector.broadcast %cst_8 : f32 to vector<8x64xf32>
    %43 = arith.subf %42, %34 : vector<8x64xf32>
    %44 = arith.mulf %43, %41 : vector<8x64xf32>
    %45 = arith.mulf %34, %21 : vector<8x64xf32>
    %46 = arith.addf %44, %45 : vector<8x64xf32>
    %47 = vector.extract_strided_slice %20 {offsets = [8, 0], sizes = [8, 192], strides = [1, 1]} : vector<64x192xf32> to vector<8x192xf32>
    %48 = arith.truncf %46 : vector<8x64xf32> to vector<8x64xbf16>
    %cst_9 = arith.constant dense<0.000000e+00> : vector<8x192xf32>
    %49 = tpu.matmul %48, %5, %cst_9 {dimension_numbers = #tpu.dot_dimension_numbers<[1], [0], [0], [1], [0, 0, 1, 1], [], []>} : vector<8x64xbf16>, vector<64x192xbf16>, vector<8x192xf32> -> vector<8x192xf32>
    %50 = vector.extract_strided_slice %47 {offsets = [0, 0], sizes = [8, 128], strides = [1, 1]} : vector<8x192xf32> to vector<8x128xf32>
    %51 = vector.extract_strided_slice %49 {offsets = [0, 0], sizes = [8, 128], strides = [1, 1]} : vector<8x192xf32> to vector<8x128xf32>
    %52 = arith.addf %50, %51 : vector<8x128xf32>
    %53 = arith.negf %52 : vector<8x128xf32>
    %54 = math.exp %53 : vector<8x128xf32>
    %cst_10 = arith.constant 1.000000e+00 : f32
    %55 = vector.broadcast %cst_10 : f32 to vector<8x128xf32>
    %56 = arith.addf %55, %54 : vector<8x128xf32>
    %57 = arith.divf %55, %56 : vector<8x128xf32>
    %58 = vector.extract_strided_slice %57 {offsets = [0, 0], sizes = [8, 64], strides = [1, 1]} : vector<8x128xf32> to vector<8x64xf32>
    %59 = vector.extract_strided_slice %57 {offsets = [0, 64], sizes = [8, 64], strides = [1, 1]} : vector<8x128xf32> to vector<8x64xf32>
    %60 = vector.extract_strided_slice %47 {offsets = [0, 128], sizes = [8, 64], strides = [1, 1]} : vector<8x192xf32> to vector<8x64xf32>
    %61 = vector.extract_strided_slice %49 {offsets = [0, 128], sizes = [8, 64], strides = [1, 1]} : vector<8x192xf32> to vector<8x64xf32>
    %62 = vector.broadcast %3 : vector<1x64xf32> to vector<8x64xf32>
    %63 = arith.addf %61, %62 : vector<8x64xf32>
    %64 = arith.mulf %58, %63 : vector<8x64xf32>
    %65 = arith.addf %60, %64 : vector<8x64xf32>
    %66 = math.tanh %65 : vector<8x64xf32>
    %cst_11 = arith.constant 1.000000e+00 : f32
    %67 = vector.broadcast %cst_11 : f32 to vector<8x64xf32>
    %68 = arith.subf %67, %59 : vector<8x64xf32>
    %69 = arith.mulf %68, %66 : vector<8x64xf32>
    %70 = arith.mulf %59, %46 : vector<8x64xf32>
    %71 = arith.addf %69, %70 : vector<8x64xf32>
    %72 = vector.extract_strided_slice %20 {offsets = [16, 0], sizes = [8, 192], strides = [1, 1]} : vector<64x192xf32> to vector<8x192xf32>
    %73 = arith.truncf %71 : vector<8x64xf32> to vector<8x64xbf16>
    %cst_12 = arith.constant dense<0.000000e+00> : vector<8x192xf32>
    %74 = tpu.matmul %73, %5, %cst_12 {dimension_numbers = #tpu.dot_dimension_numbers<[1], [0], [0], [1], [0, 0, 1, 1], [], []>} : vector<8x64xbf16>, vector<64x192xbf16>, vector<8x192xf32> -> vector<8x192xf32>
    %75 = vector.extract_strided_slice %72 {offsets = [0, 0], sizes = [8, 128], strides = [1, 1]} : vector<8x192xf32> to vector<8x128xf32>
    %76 = vector.extract_strided_slice %74 {offsets = [0, 0], sizes = [8, 128], strides = [1, 1]} : vector<8x192xf32> to vector<8x128xf32>
    %77 = arith.addf %75, %76 : vector<8x128xf32>
    %78 = arith.negf %77 : vector<8x128xf32>
    %79 = math.exp %78 : vector<8x128xf32>
    %cst_13 = arith.constant 1.000000e+00 : f32
    %80 = vector.broadcast %cst_13 : f32 to vector<8x128xf32>
    %81 = arith.addf %80, %79 : vector<8x128xf32>
    %82 = arith.divf %80, %81 : vector<8x128xf32>
    %83 = vector.extract_strided_slice %82 {offsets = [0, 0], sizes = [8, 64], strides = [1, 1]} : vector<8x128xf32> to vector<8x64xf32>
    %84 = vector.extract_strided_slice %82 {offsets = [0, 64], sizes = [8, 64], strides = [1, 1]} : vector<8x128xf32> to vector<8x64xf32>
    %85 = vector.extract_strided_slice %72 {offsets = [0, 128], sizes = [8, 64], strides = [1, 1]} : vector<8x192xf32> to vector<8x64xf32>
    %86 = vector.extract_strided_slice %74 {offsets = [0, 128], sizes = [8, 64], strides = [1, 1]} : vector<8x192xf32> to vector<8x64xf32>
    %87 = vector.broadcast %3 : vector<1x64xf32> to vector<8x64xf32>
    %88 = arith.addf %86, %87 : vector<8x64xf32>
    %89 = arith.mulf %83, %88 : vector<8x64xf32>
    %90 = arith.addf %85, %89 : vector<8x64xf32>
    %91 = math.tanh %90 : vector<8x64xf32>
    %cst_14 = arith.constant 1.000000e+00 : f32
    %92 = vector.broadcast %cst_14 : f32 to vector<8x64xf32>
    %93 = arith.subf %92, %84 : vector<8x64xf32>
    %94 = arith.mulf %93, %91 : vector<8x64xf32>
    %95 = arith.mulf %84, %71 : vector<8x64xf32>
    %96 = arith.addf %94, %95 : vector<8x64xf32>
    %97 = vector.extract_strided_slice %20 {offsets = [24, 0], sizes = [8, 192], strides = [1, 1]} : vector<64x192xf32> to vector<8x192xf32>
    %98 = arith.truncf %96 : vector<8x64xf32> to vector<8x64xbf16>
    %cst_15 = arith.constant dense<0.000000e+00> : vector<8x192xf32>
    %99 = tpu.matmul %98, %5, %cst_15 {dimension_numbers = #tpu.dot_dimension_numbers<[1], [0], [0], [1], [0, 0, 1, 1], [], []>} : vector<8x64xbf16>, vector<64x192xbf16>, vector<8x192xf32> -> vector<8x192xf32>
    %100 = vector.extract_strided_slice %97 {offsets = [0, 0], sizes = [8, 128], strides = [1, 1]} : vector<8x192xf32> to vector<8x128xf32>
    %101 = vector.extract_strided_slice %99 {offsets = [0, 0], sizes = [8, 128], strides = [1, 1]} : vector<8x192xf32> to vector<8x128xf32>
    %102 = arith.addf %100, %101 : vector<8x128xf32>
    %103 = arith.negf %102 : vector<8x128xf32>
    %104 = math.exp %103 : vector<8x128xf32>
    %cst_16 = arith.constant 1.000000e+00 : f32
    %105 = vector.broadcast %cst_16 : f32 to vector<8x128xf32>
    %106 = arith.addf %105, %104 : vector<8x128xf32>
    %107 = arith.divf %105, %106 : vector<8x128xf32>
    %108 = vector.extract_strided_slice %107 {offsets = [0, 0], sizes = [8, 64], strides = [1, 1]} : vector<8x128xf32> to vector<8x64xf32>
    %109 = vector.extract_strided_slice %107 {offsets = [0, 64], sizes = [8, 64], strides = [1, 1]} : vector<8x128xf32> to vector<8x64xf32>
    %110 = vector.extract_strided_slice %97 {offsets = [0, 128], sizes = [8, 64], strides = [1, 1]} : vector<8x192xf32> to vector<8x64xf32>
    %111 = vector.extract_strided_slice %99 {offsets = [0, 128], sizes = [8, 64], strides = [1, 1]} : vector<8x192xf32> to vector<8x64xf32>
    %112 = vector.broadcast %3 : vector<1x64xf32> to vector<8x64xf32>
    %113 = arith.addf %111, %112 : vector<8x64xf32>
    %114 = arith.mulf %108, %113 : vector<8x64xf32>
    %115 = arith.addf %110, %114 : vector<8x64xf32>
    %116 = math.tanh %115 : vector<8x64xf32>
    %cst_17 = arith.constant 1.000000e+00 : f32
    %117 = vector.broadcast %cst_17 : f32 to vector<8x64xf32>
    %118 = arith.subf %117, %109 : vector<8x64xf32>
    %119 = arith.mulf %118, %116 : vector<8x64xf32>
    %120 = arith.mulf %109, %96 : vector<8x64xf32>
    %121 = arith.addf %119, %120 : vector<8x64xf32>
    %122 = vector.extract_strided_slice %20 {offsets = [32, 0], sizes = [8, 192], strides = [1, 1]} : vector<64x192xf32> to vector<8x192xf32>
    %123 = arith.truncf %121 : vector<8x64xf32> to vector<8x64xbf16>
    %cst_18 = arith.constant dense<0.000000e+00> : vector<8x192xf32>
    %124 = tpu.matmul %123, %5, %cst_18 {dimension_numbers = #tpu.dot_dimension_numbers<[1], [0], [0], [1], [0, 0, 1, 1], [], []>} : vector<8x64xbf16>, vector<64x192xbf16>, vector<8x192xf32> -> vector<8x192xf32>
    %125 = vector.extract_strided_slice %122 {offsets = [0, 0], sizes = [8, 128], strides = [1, 1]} : vector<8x192xf32> to vector<8x128xf32>
    %126 = vector.extract_strided_slice %124 {offsets = [0, 0], sizes = [8, 128], strides = [1, 1]} : vector<8x192xf32> to vector<8x128xf32>
    %127 = arith.addf %125, %126 : vector<8x128xf32>
    %128 = arith.negf %127 : vector<8x128xf32>
    %129 = math.exp %128 : vector<8x128xf32>
    %cst_19 = arith.constant 1.000000e+00 : f32
    %130 = vector.broadcast %cst_19 : f32 to vector<8x128xf32>
    %131 = arith.addf %130, %129 : vector<8x128xf32>
    %132 = arith.divf %130, %131 : vector<8x128xf32>
    %133 = vector.extract_strided_slice %132 {offsets = [0, 0], sizes = [8, 64], strides = [1, 1]} : vector<8x128xf32> to vector<8x64xf32>
    %134 = vector.extract_strided_slice %132 {offsets = [0, 64], sizes = [8, 64], strides = [1, 1]} : vector<8x128xf32> to vector<8x64xf32>
    %135 = vector.extract_strided_slice %122 {offsets = [0, 128], sizes = [8, 64], strides = [1, 1]} : vector<8x192xf32> to vector<8x64xf32>
    %136 = vector.extract_strided_slice %124 {offsets = [0, 128], sizes = [8, 64], strides = [1, 1]} : vector<8x192xf32> to vector<8x64xf32>
    %137 = vector.broadcast %3 : vector<1x64xf32> to vector<8x64xf32>
    %138 = arith.addf %136, %137 : vector<8x64xf32>
    %139 = arith.mulf %133, %138 : vector<8x64xf32>
    %140 = arith.addf %135, %139 : vector<8x64xf32>
    %141 = math.tanh %140 : vector<8x64xf32>
    %cst_20 = arith.constant 1.000000e+00 : f32
    %142 = vector.broadcast %cst_20 : f32 to vector<8x64xf32>
    %143 = arith.subf %142, %134 : vector<8x64xf32>
    %144 = arith.mulf %143, %141 : vector<8x64xf32>
    %145 = arith.mulf %134, %121 : vector<8x64xf32>
    %146 = arith.addf %144, %145 : vector<8x64xf32>
    %147 = vector.extract_strided_slice %20 {offsets = [40, 0], sizes = [8, 192], strides = [1, 1]} : vector<64x192xf32> to vector<8x192xf32>
    %148 = arith.truncf %146 : vector<8x64xf32> to vector<8x64xbf16>
    %cst_21 = arith.constant dense<0.000000e+00> : vector<8x192xf32>
    %149 = tpu.matmul %148, %5, %cst_21 {dimension_numbers = #tpu.dot_dimension_numbers<[1], [0], [0], [1], [0, 0, 1, 1], [], []>} : vector<8x64xbf16>, vector<64x192xbf16>, vector<8x192xf32> -> vector<8x192xf32>
    %150 = vector.extract_strided_slice %147 {offsets = [0, 0], sizes = [8, 128], strides = [1, 1]} : vector<8x192xf32> to vector<8x128xf32>
    %151 = vector.extract_strided_slice %149 {offsets = [0, 0], sizes = [8, 128], strides = [1, 1]} : vector<8x192xf32> to vector<8x128xf32>
    %152 = arith.addf %150, %151 : vector<8x128xf32>
    %153 = arith.negf %152 : vector<8x128xf32>
    %154 = math.exp %153 : vector<8x128xf32>
    %cst_22 = arith.constant 1.000000e+00 : f32
    %155 = vector.broadcast %cst_22 : f32 to vector<8x128xf32>
    %156 = arith.addf %155, %154 : vector<8x128xf32>
    %157 = arith.divf %155, %156 : vector<8x128xf32>
    %158 = vector.extract_strided_slice %157 {offsets = [0, 0], sizes = [8, 64], strides = [1, 1]} : vector<8x128xf32> to vector<8x64xf32>
    %159 = vector.extract_strided_slice %157 {offsets = [0, 64], sizes = [8, 64], strides = [1, 1]} : vector<8x128xf32> to vector<8x64xf32>
    %160 = vector.extract_strided_slice %147 {offsets = [0, 128], sizes = [8, 64], strides = [1, 1]} : vector<8x192xf32> to vector<8x64xf32>
    %161 = vector.extract_strided_slice %149 {offsets = [0, 128], sizes = [8, 64], strides = [1, 1]} : vector<8x192xf32> to vector<8x64xf32>
    %162 = vector.broadcast %3 : vector<1x64xf32> to vector<8x64xf32>
    %163 = arith.addf %161, %162 : vector<8x64xf32>
    %164 = arith.mulf %158, %163 : vector<8x64xf32>
    %165 = arith.addf %160, %164 : vector<8x64xf32>
    %166 = math.tanh %165 : vector<8x64xf32>
    %cst_23 = arith.constant 1.000000e+00 : f32
    %167 = vector.broadcast %cst_23 : f32 to vector<8x64xf32>
    %168 = arith.subf %167, %159 : vector<8x64xf32>
    %169 = arith.mulf %168, %166 : vector<8x64xf32>
    %170 = arith.mulf %159, %146 : vector<8x64xf32>
    %171 = arith.addf %169, %170 : vector<8x64xf32>
    %172 = vector.extract_strided_slice %20 {offsets = [48, 0], sizes = [8, 192], strides = [1, 1]} : vector<64x192xf32> to vector<8x192xf32>
    %173 = arith.truncf %171 : vector<8x64xf32> to vector<8x64xbf16>
    %cst_24 = arith.constant dense<0.000000e+00> : vector<8x192xf32>
    %174 = tpu.matmul %173, %5, %cst_24 {dimension_numbers = #tpu.dot_dimension_numbers<[1], [0], [0], [1], [0, 0, 1, 1], [], []>} : vector<8x64xbf16>, vector<64x192xbf16>, vector<8x192xf32> -> vector<8x192xf32>
    %175 = vector.extract_strided_slice %172 {offsets = [0, 0], sizes = [8, 128], strides = [1, 1]} : vector<8x192xf32> to vector<8x128xf32>
    %176 = vector.extract_strided_slice %174 {offsets = [0, 0], sizes = [8, 128], strides = [1, 1]} : vector<8x192xf32> to vector<8x128xf32>
    %177 = arith.addf %175, %176 : vector<8x128xf32>
    %178 = arith.negf %177 : vector<8x128xf32>
    %179 = math.exp %178 : vector<8x128xf32>
    %cst_25 = arith.constant 1.000000e+00 : f32
    %180 = vector.broadcast %cst_25 : f32 to vector<8x128xf32>
    %181 = arith.addf %180, %179 : vector<8x128xf32>
    %182 = arith.divf %180, %181 : vector<8x128xf32>
    %183 = vector.extract_strided_slice %182 {offsets = [0, 0], sizes = [8, 64], strides = [1, 1]} : vector<8x128xf32> to vector<8x64xf32>
    %184 = vector.extract_strided_slice %182 {offsets = [0, 64], sizes = [8, 64], strides = [1, 1]} : vector<8x128xf32> to vector<8x64xf32>
    %185 = vector.extract_strided_slice %172 {offsets = [0, 128], sizes = [8, 64], strides = [1, 1]} : vector<8x192xf32> to vector<8x64xf32>
    %186 = vector.extract_strided_slice %174 {offsets = [0, 128], sizes = [8, 64], strides = [1, 1]} : vector<8x192xf32> to vector<8x64xf32>
    %187 = vector.broadcast %3 : vector<1x64xf32> to vector<8x64xf32>
    %188 = arith.addf %186, %187 : vector<8x64xf32>
    %189 = arith.mulf %183, %188 : vector<8x64xf32>
    %190 = arith.addf %185, %189 : vector<8x64xf32>
    %191 = math.tanh %190 : vector<8x64xf32>
    %cst_26 = arith.constant 1.000000e+00 : f32
    %192 = vector.broadcast %cst_26 : f32 to vector<8x64xf32>
    %193 = arith.subf %192, %184 : vector<8x64xf32>
    %194 = arith.mulf %193, %191 : vector<8x64xf32>
    %195 = arith.mulf %184, %171 : vector<8x64xf32>
    %196 = arith.addf %194, %195 : vector<8x64xf32>
    %197 = vector.extract_strided_slice %20 {offsets = [56, 0], sizes = [8, 192], strides = [1, 1]} : vector<64x192xf32> to vector<8x192xf32>
    %198 = arith.truncf %196 : vector<8x64xf32> to vector<8x64xbf16>
    %cst_27 = arith.constant dense<0.000000e+00> : vector<8x192xf32>
    %199 = tpu.matmul %198, %5, %cst_27 {dimension_numbers = #tpu.dot_dimension_numbers<[1], [0], [0], [1], [0, 0, 1, 1], [], []>} : vector<8x64xbf16>, vector<64x192xbf16>, vector<8x192xf32> -> vector<8x192xf32>
    %200 = vector.extract_strided_slice %197 {offsets = [0, 0], sizes = [8, 128], strides = [1, 1]} : vector<8x192xf32> to vector<8x128xf32>
    %201 = vector.extract_strided_slice %199 {offsets = [0, 0], sizes = [8, 128], strides = [1, 1]} : vector<8x192xf32> to vector<8x128xf32>
    %202 = arith.addf %200, %201 : vector<8x128xf32>
    %203 = arith.negf %202 : vector<8x128xf32>
    %204 = math.exp %203 : vector<8x128xf32>
    %cst_28 = arith.constant 1.000000e+00 : f32
    %205 = vector.broadcast %cst_28 : f32 to vector<8x128xf32>
    %206 = arith.addf %205, %204 : vector<8x128xf32>
    %207 = arith.divf %205, %206 : vector<8x128xf32>
    %208 = vector.extract_strided_slice %207 {offsets = [0, 0], sizes = [8, 64], strides = [1, 1]} : vector<8x128xf32> to vector<8x64xf32>
    %209 = vector.extract_strided_slice %207 {offsets = [0, 64], sizes = [8, 64], strides = [1, 1]} : vector<8x128xf32> to vector<8x64xf32>
    %210 = vector.extract_strided_slice %197 {offsets = [0, 128], sizes = [8, 64], strides = [1, 1]} : vector<8x192xf32> to vector<8x64xf32>
    %211 = vector.extract_strided_slice %199 {offsets = [0, 128], sizes = [8, 64], strides = [1, 1]} : vector<8x192xf32> to vector<8x64xf32>
    %212 = vector.broadcast %3 : vector<1x64xf32> to vector<8x64xf32>
    %213 = arith.addf %211, %212 : vector<8x64xf32>
    %214 = arith.mulf %208, %213 : vector<8x64xf32>
    %215 = arith.addf %210, %214 : vector<8x64xf32>
    %216 = math.tanh %215 : vector<8x64xf32>
    %cst_29 = arith.constant 1.000000e+00 : f32
    %217 = vector.broadcast %cst_29 : f32 to vector<8x64xf32>
    %218 = arith.subf %217, %209 : vector<8x64xf32>
    %219 = arith.mulf %218, %216 : vector<8x64xf32>
    %220 = arith.mulf %209, %196 : vector<8x64xf32>
    %221 = arith.addf %219, %220 : vector<8x64xf32>
    %222 = vector.extract_strided_slice %2 {offsets = [0, 64], sizes = [1, 64], strides = [1, 1]} : vector<1x192xf32> to vector<1x64xf32>
    %223 = vector.extract_strided_slice %2 {offsets = [0, 128], sizes = [1, 8], strides = [1, 1]} : vector<1x192xf32> to vector<1x8xf32>
    %c8 = arith.constant 8 : index
    %c0_30 = arith.constant 0 : index
    %224 = vector.load %arg1[%c8, %c0_30] : memref<264x192xf32, #tpu.memory_space<vmem>>, vector<64x8xf32>
    %225 = vector.extract_strided_slice %46 {offsets = [0, 0], sizes = [8, 32], strides = [1, 1]} : vector<8x64xf32> to vector<8x32xf32>
    %226 = vector.extract_strided_slice %221 {offsets = [0, 32], sizes = [8, 32], strides = [1, 1]} : vector<8x64xf32> to vector<8x32xf32>
    %227 = tpu.concatenate %225, %226 in 1 : vector<8x32xf32>, vector<8x32xf32> -> vector<8x64xf32>
    %228 = vector.extract_strided_slice %71 {offsets = [0, 0], sizes = [8, 32], strides = [1, 1]} : vector<8x64xf32> to vector<8x32xf32>
    %229 = vector.extract_strided_slice %196 {offsets = [0, 32], sizes = [8, 32], strides = [1, 1]} : vector<8x64xf32> to vector<8x32xf32>
    %230 = tpu.concatenate %228, %229 in 1 : vector<8x32xf32>, vector<8x32xf32> -> vector<8x64xf32>
    %231 = vector.extract_strided_slice %96 {offsets = [0, 0], sizes = [8, 32], strides = [1, 1]} : vector<8x64xf32> to vector<8x32xf32>
    %232 = vector.extract_strided_slice %171 {offsets = [0, 32], sizes = [8, 32], strides = [1, 1]} : vector<8x64xf32> to vector<8x32xf32>
    %233 = tpu.concatenate %231, %232 in 1 : vector<8x32xf32>, vector<8x32xf32> -> vector<8x64xf32>
    %234 = vector.extract_strided_slice %121 {offsets = [0, 0], sizes = [8, 32], strides = [1, 1]} : vector<8x64xf32> to vector<8x32xf32>
    %235 = vector.extract_strided_slice %146 {offsets = [0, 32], sizes = [8, 32], strides = [1, 1]} : vector<8x64xf32> to vector<8x32xf32>
    %236 = tpu.concatenate %234, %235 in 1 : vector<8x32xf32>, vector<8x32xf32> -> vector<8x64xf32>
    %237 = vector.extract_strided_slice %146 {offsets = [0, 0], sizes = [8, 32], strides = [1, 1]} : vector<8x64xf32> to vector<8x32xf32>
    %238 = vector.extract_strided_slice %121 {offsets = [0, 32], sizes = [8, 32], strides = [1, 1]} : vector<8x64xf32> to vector<8x32xf32>
    %239 = tpu.concatenate %237, %238 in 1 : vector<8x32xf32>, vector<8x32xf32> -> vector<8x64xf32>
    %240 = vector.extract_strided_slice %171 {offsets = [0, 0], sizes = [8, 32], strides = [1, 1]} : vector<8x64xf32> to vector<8x32xf32>
    %241 = vector.extract_strided_slice %96 {offsets = [0, 32], sizes = [8, 32], strides = [1, 1]} : vector<8x64xf32> to vector<8x32xf32>
    %242 = tpu.concatenate %240, %241 in 1 : vector<8x32xf32>, vector<8x32xf32> -> vector<8x64xf32>
    %243 = vector.extract_strided_slice %196 {offsets = [0, 0], sizes = [8, 32], strides = [1, 1]} : vector<8x64xf32> to vector<8x32xf32>
    %244 = vector.extract_strided_slice %71 {offsets = [0, 32], sizes = [8, 32], strides = [1, 1]} : vector<8x64xf32> to vector<8x32xf32>
    %245 = tpu.concatenate %243, %244 in 1 : vector<8x32xf32>, vector<8x32xf32> -> vector<8x64xf32>
    %246 = vector.extract_strided_slice %221 {offsets = [0, 0], sizes = [8, 32], strides = [1, 1]} : vector<8x64xf32> to vector<8x32xf32>
    %247 = vector.extract_strided_slice %46 {offsets = [0, 32], sizes = [8, 32], strides = [1, 1]} : vector<8x64xf32> to vector<8x32xf32>
    %248 = tpu.concatenate %246, %247 in 1 : vector<8x32xf32>, vector<8x32xf32> -> vector<8x64xf32>
    %249 = math.tanh %227 : vector<8x64xf32>
    %250 = vector.broadcast %222 : vector<1x64xf32> to vector<8x64xf32>
    %251 = arith.mulf %249, %250 : vector<8x64xf32>
    %cst_31 = arith.constant dense<0.000000e+00> : vector<8xf32>
    %252 = vector.multi_reduction <add>, %251, %cst_31 [1] : vector<8x64xf32> to vector<8xf32>
    %253 = vector.shape_cast %252 : vector<8xf32> to vector<8x1xf32>
    %254 = math.tanh %230 : vector<8x64xf32>
    %255 = vector.broadcast %222 : vector<1x64xf32> to vector<8x64xf32>
    %256 = arith.mulf %254, %255 : vector<8x64xf32>
    %cst_32 = arith.constant dense<0.000000e+00> : vector<8xf32>
    %257 = vector.multi_reduction <add>, %256, %cst_32 [1] : vector<8x64xf32> to vector<8xf32>
    %258 = vector.shape_cast %257 : vector<8xf32> to vector<8x1xf32>
    %259 = math.tanh %233 : vector<8x64xf32>
    %260 = vector.broadcast %222 : vector<1x64xf32> to vector<8x64xf32>
    %261 = arith.mulf %259, %260 : vector<8x64xf32>
    %cst_33 = arith.constant dense<0.000000e+00> : vector<8xf32>
    %262 = vector.multi_reduction <add>, %261, %cst_33 [1] : vector<8x64xf32> to vector<8xf32>
    %263 = vector.shape_cast %262 : vector<8xf32> to vector<8x1xf32>
    %264 = math.tanh %236 : vector<8x64xf32>
    %265 = vector.broadcast %222 : vector<1x64xf32> to vector<8x64xf32>
    %266 = arith.mulf %264, %265 : vector<8x64xf32>
    %cst_34 = arith.constant dense<0.000000e+00> : vector<8xf32>
    %267 = vector.multi_reduction <add>, %266, %cst_34 [1] : vector<8x64xf32> to vector<8xf32>
    %268 = vector.shape_cast %267 : vector<8xf32> to vector<8x1xf32>
    %269 = math.tanh %239 : vector<8x64xf32>
    %270 = vector.broadcast %222 : vector<1x64xf32> to vector<8x64xf32>
    %271 = arith.mulf %269, %270 : vector<8x64xf32>
    %cst_35 = arith.constant dense<0.000000e+00> : vector<8xf32>
    %272 = vector.multi_reduction <add>, %271, %cst_35 [1] : vector<8x64xf32> to vector<8xf32>
    %273 = vector.shape_cast %272 : vector<8xf32> to vector<8x1xf32>
    %274 = math.tanh %242 : vector<8x64xf32>
    %275 = vector.broadcast %222 : vector<1x64xf32> to vector<8x64xf32>
    %276 = arith.mulf %274, %275 : vector<8x64xf32>
    %cst_36 = arith.constant dense<0.000000e+00> : vector<8xf32>
    %277 = vector.multi_reduction <add>, %276, %cst_36 [1] : vector<8x64xf32> to vector<8xf32>
    %278 = vector.shape_cast %277 : vector<8xf32> to vector<8x1xf32>
    %279 = math.tanh %245 : vector<8x64xf32>
    %280 = vector.broadcast %222 : vector<1x64xf32> to vector<8x64xf32>
    %281 = arith.mulf %279, %280 : vector<8x64xf32>
    %cst_37 = arith.constant dense<0.000000e+00> : vector<8xf32>
    %282 = vector.multi_reduction <add>, %281, %cst_37 [1] : vector<8x64xf32> to vector<8xf32>
    %283 = vector.shape_cast %282 : vector<8xf32> to vector<8x1xf32>
    %284 = math.tanh %248 : vector<8x64xf32>
    %285 = vector.broadcast %222 : vector<1x64xf32> to vector<8x64xf32>
    %286 = arith.mulf %284, %285 : vector<8x64xf32>
    %cst_38 = arith.constant dense<0.000000e+00> : vector<8xf32>
    %287 = vector.multi_reduction <add>, %286, %cst_38 [1] : vector<8x64xf32> to vector<8xf32>
    %288 = vector.shape_cast %287 : vector<8xf32> to vector<8x1xf32>
    %289 = tpu.concatenate %253, %258, %263, %268, %273, %278, %283, %288 in 1 : vector<8x1xf32>, vector<8x1xf32>, vector<8x1xf32>, vector<8x1xf32>, vector<8x1xf32>, vector<8x1xf32>, vector<8x1xf32>, vector<8x1xf32> -> vector<8x8xf32>
    %cst_39 = arith.constant dense<0xFF800000> : vector<8xf32>
    %290 = vector.multi_reduction <maximumf>, %289, %cst_39 [1] : vector<8x8xf32> to vector<8xf32>
    %291 = vector.shape_cast %290 : vector<8xf32> to vector<8x1xf32>
    %292 = vector.broadcast %291 : vector<8x1xf32> to vector<8x8xf32>
    %293 = arith.subf %289, %292 : vector<8x8xf32>
    %294 = math.exp %293 : vector<8x8xf32>
    %cst_40 = arith.constant dense<0.000000e+00> : vector<8xf32>
    %295 = vector.multi_reduction <add>, %294, %cst_40 [1] : vector<8x8xf32> to vector<8xf32>
    %296 = vector.shape_cast %295 : vector<8xf32> to vector<8x1xf32>
    %297 = vector.broadcast %296 : vector<8x1xf32> to vector<8x8xf32>
    %298 = arith.divf %294, %297 : vector<8x8xf32>
    %299 = vector.extract_strided_slice %298 {offsets = [0, 0], sizes = [8, 1], strides = [1, 1]} : vector<8x8xf32> to vector<8x1xf32>
    %300 = vector.broadcast %299 : vector<8x1xf32> to vector<8x64xf32>
    %301 = arith.mulf %227, %300 : vector<8x64xf32>
    %302 = vector.extract_strided_slice %298 {offsets = [0, 1], sizes = [8, 1], strides = [1, 1]} : vector<8x8xf32> to vector<8x1xf32>
    %303 = vector.broadcast %302 : vector<8x1xf32> to vector<8x64xf32>
    %304 = arith.mulf %230, %303 : vector<8x64xf32>
    %305 = arith.addf %301, %304 : vector<8x64xf32>
    %306 = vector.extract_strided_slice %298 {offsets = [0, 2], sizes = [8, 1], strides = [1, 1]} : vector<8x8xf32> to vector<8x1xf32>
    %307 = vector.broadcast %306 : vector<8x1xf32> to vector<8x64xf32>
    %308 = arith.mulf %233, %307 : vector<8x64xf32>
    %309 = arith.addf %305, %308 : vector<8x64xf32>
    %310 = vector.extract_strided_slice %298 {offsets = [0, 3], sizes = [8, 1], strides = [1, 1]} : vector<8x8xf32> to vector<8x1xf32>
    %311 = vector.broadcast %310 : vector<8x1xf32> to vector<8x64xf32>
    %312 = arith.mulf %236, %311 : vector<8x64xf32>
    %313 = arith.addf %309, %312 : vector<8x64xf32>
    %314 = vector.extract_strided_slice %298 {offsets = [0, 4], sizes = [8, 1], strides = [1, 1]} : vector<8x8xf32> to vector<8x1xf32>
    %315 = vector.broadcast %314 : vector<8x1xf32> to vector<8x64xf32>
    %316 = arith.mulf %239, %315 : vector<8x64xf32>
    %317 = arith.addf %313, %316 : vector<8x64xf32>
    %318 = vector.extract_strided_slice %298 {offsets = [0, 5], sizes = [8, 1], strides = [1, 1]} : vector<8x8xf32> to vector<8x1xf32>
    %319 = vector.broadcast %318 : vector<8x1xf32> to vector<8x64xf32>
    %320 = arith.mulf %242, %319 : vector<8x64xf32>
    %321 = arith.addf %317, %320 : vector<8x64xf32>
    %322 = vector.extract_strided_slice %298 {offsets = [0, 6], sizes = [8, 1], strides = [1, 1]} : vector<8x8xf32> to vector<8x1xf32>
    %323 = vector.broadcast %322 : vector<8x1xf32> to vector<8x64xf32>
    %324 = arith.mulf %245, %323 : vector<8x64xf32>
    %325 = arith.addf %321, %324 : vector<8x64xf32>
    %326 = vector.extract_strided_slice %298 {offsets = [0, 7], sizes = [8, 1], strides = [1, 1]} : vector<8x8xf32> to vector<8x1xf32>
    %327 = vector.broadcast %326 : vector<8x1xf32> to vector<8x64xf32>
    %328 = arith.mulf %248, %327 : vector<8x64xf32>
    %329 = arith.addf %325, %328 : vector<8x64xf32>
    %330 = math.tanh %329 : vector<8x64xf32>
    %cst_41 = arith.constant dense<0.000000e+00> : vector<8x8xf32>
    %331 = tpu.matmul %330, %224, %cst_41 {dimension_numbers = #tpu.dot_dimension_numbers<[1], [0], [0], [1], [0, 0, 1, 1], [], []>} : vector<8x64xf32>, vector<64x8xf32>, vector<8x8xf32> -> vector<8x8xf32>
    %332 = vector.broadcast %223 : vector<1x8xf32> to vector<8x8xf32>
    %333 = arith.addf %331, %332 : vector<8x8xf32>
    %c0_42 = arith.constant 0 : index
    %c0_43 = arith.constant 0 : index
    %334 = vector.load %arg2[%c0_42, %c0_43] : memref<8x8xf32, #tpu.memory_space<vmem>>, vector<8x8xf32>
    tpu.vector_store %arg2[%c0_42, %c0_43], %333 {strides = array<i32>} : memref<8x8xf32, #tpu.memory_space<vmem>>, vector<8x8xf32>,
    return
  }
}

</mosaic_0001>

<llo_original>
// kernel: attention_rnn_forward.1
$region0: #{attention_rnn_forward.1}
  #allocation0 [shape = 'u32[]', space=smem, size = 0x4, offset = 0x4, fixed_abs, tag = 'smem constant byte address 0x4 - core index']
  #allocation1 [shape = 'u32[72,128]{1,0:T(1,128)}', space=vmem, size = 0x9000, scoped, tag = 'internal scratch']
  %s0 = inlined_call_operand.vmem [shape: s32[64,2], index: 0, kind: input, shape index: {}]
  %s1 = inlined_call_operand.hbm [shape: f32[264,192], index: 1, kind: input, shape index: {}]
  %s2 = inlined_call_operand.vmem [shape: f32[8,8], index: 2, kind: output, shape index: {}]
  %s3 = sld [smem:[#allocation0]]
  $region22: #{attention_rnn_forward.1} parent=0
    _
  %s5 = ssub.s32 1, %s3
  %s6 = scalar_select 0, %s5, %s3
  $region1: #{attention_rnn_forward.1} parent=0
    #allocation2 [shape = 'u8[270336]{0}', space=vmem, size = 0x42000, scoped, tag = 'input window, operand 1, single buffered']
    #allocation3 [shape = 's32[1]{0}', space=sflag, size = 0x4, scoped, tag = 'scoped memory for attention_rnn_forward.1']
    %7 = vsyncpa [#allocation3], 0
    // Predicated region
    $region2: #{attention_rnn_forward.1} parent=1 // pred_check
      _
    $region3: #{attention_rnn_forward.1} parent=1 // pred_check_branch
      %9 = sbr.rel (0) target = $region5
    $region4: #{attention_rnn_forward.1} parent=1 // pred_region
      _
    $region5: #{attention_rnn_forward.1} parent=1 // pred_fallthru
      _
    // Predicated region
    $region6: #{attention_rnn_forward.1} parent=1 // pred_check
      _
    $region7: #{attention_rnn_forward.1} parent=1 // pred_check_branch
      %11 = sbr.rel (0) target = $region9
    $region8: #{attention_rnn_forward.1} parent=1 // pred_region
      %13 = vsyncadd [#allocation3], 0
      %s14 = sshll.u32 %s1, 4
      %s15 = int_to_ptr.hbm [resolvable:$true] %s14
      %s16 = sshll.u32 [#allocation2], 4
      %s17 = int_to_ptr.vmem [resolvable:$true] %s16
      %22 = dma.hbm_to_vmem [thread:$0]  %s15, 8448, %s17, [#allocation3], 256, 256, 16
    $region9: #{attention_rnn_forward.1} parent=1 // pred_fallthru
      _
    // Predicated region
    $region10: #{attention_rnn_forward.1} parent=1 // pred_check
      _
    $region11: #{attention_rnn_forward.1} parent=1 // pred_check_branch
      %24 = sbr.rel (0) target = $region13
    $region12: #{attention_rnn_forward.1} parent=1 // pred_region
      %26 = dma.done [#allocation3], 8448
    $region13: #{attention_rnn_forward.1} parent=1 // pred_fallthru
      _
    %v28 = vld [vmem:[#allocation2] sm:$0xff]
    %v29 = vld [vmem:[#allocation2 + $0x8] sm:$0xff]
    %v30 = vld [vmem:[#allocation2 + $0x90] sm:$0xff]
    %v31 = vld [vmem:[#allocation2 + $0x98] sm:$0xff]
    %v32 = vld [vmem:[#allocation2 + $0xa0] sm:$0xff]
    %v33 = vld [vmem:[#allocation2 + $0xa8] sm:$0xff]
    %v34 = vld [vmem:[#allocation2 + $0xb0] sm:$0xff]
    %v35 = vld [vmem:[#allocation2 + $0xb8] sm:$0xff]
    %v36 = vld [vmem:[#allocation2 + $0xc0] sm:$0xff]
    %v37 = vld [vmem:[#allocation2 + $0xc8] sm:$0xff]
    %v38 = vld [vmem:[#allocation2 + $0xd0] sm:$0xff]
    %v39 = vld [vmem:[#allocation2 + $0xd8] sm:$0xff]
    %v40 = vld [vmem:[#allocation2 + $0xe0] sm:$0xff]
    %v41 = vld [vmem:[#allocation2 + $0xe8] sm:$0xff]
    %v42 = vld [vmem:[#allocation2 + $0xf0] sm:$0xff]
    %v43 = vld [vmem:[#allocation2 + $0xf8] sm:$0xff]
    %v44 = vld [vmem:[#allocation2 + $0x100] sm:$0xff]
    %v45 = vld [vmem:[#allocation2 + $0x108] sm:$0xff]
    %v46 = vpack.c.bf16 %v32, %v30
    %v47 = vpack.c.bf16 %v33, %v31
    %v48 = vpack.c.bf16 %v36, %v34
    %v49 = vpack.c.bf16 %v37, %v35
    %v50 = vpack.c.bf16 %v40, %v38
    %v51 = vpack.c.bf16 %v41, %v39
    %v52 = vpack.c.bf16 %v44, %v42
    %v53 = vpack.c.bf16 %v45, %v43
    %v54 = vld [vmem:[#allocation2 + $0x110] sm:$0xff]
    %v55 = vld [vmem:[#allocation2 + $0x118] sm:$0xff]
    %v56 = vld [vmem:[#allocation2 + $0x120] sm:$0xff]
    %v57 = vld [vmem:[#allocation2 + $0x128] sm:$0xff]
    %v58 = vld [vmem:[#allocation2 + $0x130] sm:$0xff]
    %v59 = vld [vmem:[#allocation2 + $0x138] sm:$0xff]
    %v60 = vld [vmem:[#allocation2 + $0x140] sm:$0xff]
    %v61 = vld [vmem:[#allocation2 + $0x148] sm:$0xff]
    %v62 = vld [vmem:[#allocation2 + $0x150] sm:$0xff]
    %v63 = vld [vmem:[#allocation2 + $0x158] sm:$0xff]
    %v64 = vld [vmem:[#allocation2 + $0x160] sm:$0xff]
    %v65 = vld [vmem:[#allocation2 + $0x168] sm:$0xff]
    %v66 = vld [vmem:[#allocation2 + $0x170] sm:$0xff]
    %v67 = vld [vmem:[#allocation2 + $0x178] sm:$0xff]
    %v68 = vld [vmem:[#allocation2 + $0x180] sm:$0xff]
    %v69 = vld [vmem:[#allocation2 + $0x188] sm:$0xff]
    %v70 = vld [vmem:[#allocation2 + $0x190] sm:$0xff]
    %v71 = vld [vmem:[#allocation2 + $0x198] sm:$0xff]
    %v72 = vld [vmem:[#allocation2 + $0x1a0] sm:$0xff]
    %v73 = vld [vmem:[#allocation2 + $0x1a8] sm:$0xff]
    %v74 = vld [vmem:[#allocation2 + $0x1b0] sm:$0xff]
    %v75 = vld [vmem:[#allocation2 + $0x1b8] sm:$0xff]
    %v76 = vld [vmem:[#allocation2 + $0x1c0] sm:$0xff]
    %v77 = vld [vmem:[#allocation2 + $0x1c8] sm:$0xff]
    %v78 = vld [vmem:[#allocation2 + $0x1d0] sm:$0xff]
    %v79 = vld [vmem:[#allocation2 + $0x1d8] sm:$0xff]
    %v80 = vld [vmem:[#allocation2 + $0x1e0] sm:$0xff]
    %v81 = vld [vmem:[#allocation2 + $0x1e8] sm:$0xff]
    %v82 = vld [vmem:[#allocation2 + $0x1f0] sm:$0xff]
    %v83 = vld [vmem:[#allocation2 + $0x1f8] sm:$0xff]
    %v84 = vld [vmem:[#allocation2 + $0x200] sm:$0xff]
    %v85 = vld [vmem:[#allocation2 + $0x208] sm:$0xff]
    %v86 = vld [vmem:[%s0] sm:$0xff]
    %v87 = vld [vmem:[%s0 + $0x8] sm:$0xff]
    %v88 = vld [vmem:[%s0 + $0x10] sm:$0xff]
    %v89 = vld [vmem:[%s0 + $0x18] sm:$0xff]
    %v90 = vld [vmem:[%s0 + $0x20] sm:$0xff]
    %v91 = vld [vmem:[%s0 + $0x28] sm:$0xff]
    %v92 = vld [vmem:[%s0 + $0x30] sm:$0xff]
    %v93 = vld [vmem:[%s0 + $0x38] sm:$0xff]
    %v94 = vlaneseq
    %v95 = vand.u32 %v94, 127
    %96 = vset.pattern.permute.xlu0 0
    %97 = vperm.xlu0 %96, %v86
    %v98 = vpop.permute.xlu0 %97
    %99 = vset.pattern.permute.xlu0 0
    %100 = vperm.xlu0 %99, %v87
    %v101 = vpop.permute.xlu0 %100
    %102 = vset.pattern.permute.xlu0 0
    %103 = vperm.xlu0 %102, %v88
    %v104 = vpop.permute.xlu0 %103
    %105 = vset.pattern.permute.xlu0 0
    %106 = vperm.xlu0 %105, %v89
    %v107 = vpop.permute.xlu0 %106
    %108 = vset.pattern.permute.xlu0 0
    %109 = vperm.xlu0 %108, %v90
    %v110 = vpop.permute.xlu0 %109
    %111 = vset.pattern.permute.xlu0 0
    %112 = vperm.xlu0 %111, %v91
    %v113 = vpop.permute.xlu0 %112
    %114 = vset.pattern.permute.xlu0 0
    %115 = vperm.xlu0 %114, %v92
    %v116 = vpop.permute.xlu0 %115
    %117 = vset.pattern.permute.xlu0 0
    %118 = vperm.xlu0 %117, %v93
    %v119 = vpop.permute.xlu0 %118
    %vm120 = vcmp.eq.s32.totalorder %v95, %v98
    %vm121 = vcmp.eq.s32.totalorder %v95, %v101
    %vm122 = vcmp.eq.s32.totalorder %v95, %v104
    %vm123 = vcmp.eq.s32.totalorder %v95, %v107
    %vm124 = vcmp.eq.s32.totalorder %v95, %v110
    %vm125 = vcmp.eq.s32.totalorder %v95, %v113
    %vm126 = vcmp.eq.s32.totalorder %v95, %v116
    %vm127 = vcmp.eq.s32.totalorder %v95, %v119
    %128 = vset.pattern.permute.xlu0 1
    %129 = vperm.xlu0 %128, %v86
    %v130 = vpop.permute.xlu0 %129
    %131 = vset.pattern.permute.xlu0 1
    %132 = vperm.xlu0 %131, %v87
    %v133 = vpop.permute.xlu0 %132
    %134 = vset.pattern.permute.xlu0 1
    %135 = vperm.xlu0 %134, %v88
    %v136 = vpop.permute.xlu0 %135
    %137 = vset.pattern.permute.xlu0 1
    %138 = vperm.xlu0 %137, %v89
    %v139 = vpop.permute.xlu0 %138
    %140 = vset.pattern.permute.xlu0 1
    %141 = vperm.xlu0 %140, %v90
    %v142 = vpop.permute.xlu0 %141
    %143 = vset.pattern.permute.xlu0 1
    %144 = vperm.xlu0 %143, %v91
    %v145 = vpop.permute.xlu0 %144
    %146 = vset.pattern.permute.xlu0 1
    %147 = vperm.xlu0 %146, %v92
    %v148 = vpop.permute.xlu0 %147
    %149 = vset.pattern.permute.xlu0 1
    %150 = vperm.xlu0 %149, %v93
    %v151 = vpop.permute.xlu0 %150
    %vm152 = vcmp.eq.s32.totalorder %v95, %v130
    %vm153 = vcmp.eq.s32.totalorder %v95, %v133
    %vm154 = vcmp.eq.s32.totalorder %v95, %v136
    %vm155 = vcmp.eq.s32.totalorder %v95, %v139
    %vm156 = vcmp.eq.s32.totalorder %v95, %v142
    %vm157 = vcmp.eq.s32.totalorder %v95, %v145
    %vm158 = vcmp.eq.s32.totalorder %v95, %v148
    %vm159 = vcmp.eq.s32.totalorder %v95, %v151
    %vm160 = vmor %vm120, %vm152
    %vm161 = vmor %vm121, %vm153
    %vm162 = vmor %vm122, %vm154
    %vm163 = vmor %vm123, %vm155
    %vm164 = vmor %vm124, %vm156
    %vm165 = vmor %vm125, %vm157
    %vm166 = vmor %vm126, %vm158
    %vm167 = vmor %vm127, %vm159
    %v168 = vsel %vm160, 1, 0
    %v169 = vsel %vm161, 1, 0
    %v170 = vsel %vm162, 1, 0
    %v171 = vsel %vm163, 1, 0
    %v172 = vsel %vm164, 1, 0
    %v173 = vsel %vm165, 1, 0
    %v174 = vsel %vm166, 1, 0
    %v175 = vsel %vm167, 1, 0
    %v176 = vcvt.s32.f32 %v168
    %v177 = vcvt.s32.f32 %v169
    %v178 = vcvt.s32.f32 %v170
    %v179 = vcvt.s32.f32 %v171
    %v180 = vcvt.s32.f32 %v172
    %v181 = vcvt.s32.f32 %v173
    %v182 = vcvt.s32.f32 %v174
    %v183 = vcvt.s32.f32 %v175
    %v184 = vperm.slane %v28, 0
    %v185 = vperm.slane %v29, 0
    %186 = vmatpush.msra.mxu0 %v84
    %187 = vmatpush.msra.mxu0 %v82
    %188 = vmatpush.msra.mxu0 %v80
    %189 = vmatpush.msra.mxu0 %v78
    %190 = vmatpush.msra.mxu0 %v76
    %191 = vmatpush.msra.mxu0 %v74
    %192 = vmatpush.msra.mxu0 %v72
    %193 = vmatpush.msra.mxu0 %v70
    %194 = vmatpush.msra.mxu0 %v68
    %195 = vmatpush.msra.mxu0 %v66
    %196 = vmatpush.msra.mxu0 %v64
    %197 = vmatpush.msra.mxu0 %v62
    %198 = vmatpush.msra.mxu0 %v60
    %199 = vmatpush.msra.mxu0 %v58
    %200 = vmatpush.msra.mxu0 %v56
    %201 = vmatpush.msra.mxu0 %v54
    %202 = vmatmul.f32.gmra.mxu0 %v176
    %v203 = vpop.f32.mrf.mxu0
    %v204 = vadd.f32 %v184, %v203
    %205 = vmatmul.f32.gmra.mxu0 %v177
    %v206 = vpop.f32.mrf.mxu0
    %v207 = vadd.f32 %v184, %v206
    %208 = vmatmul.f32.gmra.mxu0 %v178
    %v209 = vpop.f32.mrf.mxu0
    %v210 = vadd.f32 %v184, %v209
    %211 = vmatmul.f32.gmra.mxu0 %v179
    %v212 = vpop.f32.mrf.mxu0
    %v213 = vadd.f32 %v184, %v212
    %214 = vmatmul.f32.gmra.mxu0 %v180
    %v215 = vpop.f32.mrf.mxu0
    %v216 = vadd.f32 %v184, %v215
    %217 = vmatmul.f32.gmra.mxu0 %v181
    %v218 = vpop.f32.mrf.mxu0
    %v219 = vadd.f32 %v184, %v218
    %220 = vmatmul.f32.gmra.mxu0 %v182
    %v221 = vpop.f32.mrf.mxu0
    %v222 = vadd.f32 %v184, %v221
    %223 = vmatmul.f32.gmra.mxu0 %v183
    %v224 = vpop.f32.mrf.mxu0
    %v225 = vadd.f32 %v184, %v224
    %226 = vdwg.mxu0
    %227 = vmatpush.msra.mxu0 %v85
    %228 = vmatpush.msra.mxu0 %v83
    %229 = vmatpush.msra.mxu0 %v81
    %230 = vmatpush.msra.mxu0 %v79
    %231 = vmatpush.msra.mxu0 %v77
    %232 = vmatpush.msra.mxu0 %v75
    %233 = vmatpush.msra.mxu0 %v73
    %234 = vmatpush.msra.mxu0 %v71
    %235 = vmatpush.msra.mxu0 %v69
    %236 = vmatpush.msra.mxu0 %v67
    %237 = vmatpush.msra.mxu0 %v65
    %238 = vmatpush.msra.mxu0 %v63
    %239 = vmatpush.msra.mxu0 %v61
    %240 = vmatpush.msra.mxu0 %v59
    %241 = vmatpush.msra.mxu0 %v57
    %242 = vmatpush.msra.mxu0 %v55
    %243 = vmatmul.f32.gmra.mxu0 %v176
    %v244 = vpop.f32.mrf.mxu0
    %v245 = vadd.f32 %v185, %v244
    %246 = vmatmul.f32.gmra.mxu0 %v177
    %v247 = vpop.f32.mrf.mxu0
    %v248 = vadd.f32 %v185, %v247
    %249 = vmatmul.f32.gmra.mxu0 %v178
    %v250 = vpop.f32.mrf.mxu0
    %v251 = vadd.f32 %v185, %v250
    %252 = vmatmul.f32.gmra.mxu0 %v179
    %v253 = vpop.f32.mrf.mxu0
    %v254 = vadd.f32 %v185, %v253
    %255 = vmatmul.f32.gmra.mxu0 %v180
    %v256 = vpop.f32.mrf.mxu0
    %v257 = vadd.f32 %v185, %v256
    %258 = vmatmul.f32.gmra.mxu0 %v181
    %v259 = vpop.f32.mrf.mxu0
    %v260 = vadd.f32 %v185, %v259
    %261 = vmatmul.f32.gmra.mxu0 %v182
    %v262 = vpop.f32.mrf.mxu0
    %v263 = vadd.f32 %v185, %v262
    %264 = vmatmul.f32.gmra.mxu0 %v183
    %v265 = vpop.f32.mrf.mxu0
    %v266 = vadd.f32 %v185, %v265
    %267 = vdwg.mxu0
    %vm268 = vcmask 523264
    %v270 = vsel %vm268, 0, 0
    %272 = vmatpush.bf16.msra.mxu0 0
    %273 = vmatpush.bf16.msra.mxu0 0
    %274 = vmatpush.bf16.msra.mxu0 0
    %275 = vmatpush.bf16.msra.mxu0 0
    %276 = vmatpush.bf16.msra.mxu0 %v52
    %277 = vmatpush.bf16.msra.mxu0 %v50
    %278 = vmatpush.bf16.msra.mxu0 %v48
    %279 = vmatpush.bf16.msra.mxu0 %v46
    %280 = vmatmul.bf16.gmra.mxu0 %v270
    %v281 = vpop.f32.mrf.mxu0
    %v282 = vadd.f32 0.0, %v281
    %v283 = vpop.f32.mrf.mxu0
    %284 = vdwg.mxu0
    %285 = vmatpush.bf16.msra.mxu0 0
    %286 = vmatpush.bf16.msra.mxu0 0
    %287 = vmatpush.bf16.msra.mxu0 0
    %288 = vmatpush.bf16.msra.mxu0 0
    %289 = vmatpush.bf16.msra.mxu0 %v53
    %290 = vmatpush.bf16.msra.mxu0 %v51
    %291 = vmatpush.bf16.msra.mxu0 %v49
    %292 = vmatpush.bf16.msra.mxu0 %v47
    %293 = vmatmul.bf16.gmra.mxu0 %v270
    %v294 = vpop.f32.mrf.mxu0
    %v295 = vadd.f32 0.0, %v294
    %v296 = vpop.f32.mrf.mxu0
    %297 = vdwg.mxu0
    %v298 = vadd.f32 %v204, %v282
    %v299 = vxor.u32 %v298, 2147483648
    %v300 = vmul.f32 %v299, 1.442695
    %v301 = vpow.pop %v300
    %v302 = vadd.f32 %v301, 1.0
    %v303 = vrcp.pop %v302
    %v304 = vmul.f32 %v302, %v303
    %v305 = vsub.f32 1.0, %v304
    %v306 = vmul.f32 %v303, %v305
    %v307 = vadd.f32 %v303, %v306
    %vm308 = vweird.f32 %v302
    %vm309 = vweird.f32 %v303
    %vm310 = vmor %vm308, %vm309
    %v311 = vsel %vm310, %v303, %v307
    %v312 = vand.u32 2147483647, %v302
    %vm313 = vcmp.eq.f32.partialorder %v312, 8.507059e+37
    %v314 = vand.u32 %v302, 2147483648
    %v315 = vor.u32 1.1754944e-38, %v314
    %v316 = vsel %vm313, %v315, %v311
    %v317 = vmul.f32 1.0, %v316
    %v318 = vperm.slane %v28, 1
    %v319 = vadd.f32 %v295, %v318
    %v320 = vmul.f32 %v317, %v319
    %v321 = vadd.f32 %v245, %v320
    %v322 = vtanh.pop %v321
    %v323 = vsub.f32 1.0, %v317
    %325 = vrot.lane.b32.xlu0 %v322, 64
    %v326 = vpop.permute.xlu0 %325
    %v328 = vmul.f32 %v323, %v326
    %v329 = vmul.f32 %v317, 0.0
    %v330 = vadd.f32 %v328, %v329
    %v331 = vpack.c.bf16 %v330, %v330
    %333 = vrot.lane.b32.xlu0 %v331, 64
    %v334 = vpop.permute.xlu0 %333
    %v336 = vsel %vm268, %v334, 0
    %338 = vmatpush.bf16.msra.mxu0 0
    %339 = vmatpush.bf16.msra.mxu0 0
    %340 = vmatpush.bf16.msra.mxu0 0
    %341 = vmatpush.bf16.msra.mxu0 0
    %342 = vmatpush.bf16.msra.mxu0 %v52
    %343 = vmatpush.bf16.msra.mxu0 %v50
    %344 = vmatpush.bf16.msra.mxu0 %v48
    %345 = vmatpush.bf16.msra.mxu0 %v46
    %346 = vmatmul.bf16.gmra.mxu0 %v336
    %v347 = vpop.f32.mrf.mxu0
    %v348 = vadd.f32 0.0, %v347
    %v349 = vpop.f32.mrf.mxu0
    %350 = vdwg.mxu0
    %351 = vmatpush.bf16.msra.mxu0 0
    %352 = vmatpush.bf16.msra.mxu0 0
    %353 = vmatpush.bf16.msra.mxu0 0
    %354 = vmatpush.bf16.msra.mxu0 0
    %355 = vmatpush.bf16.msra.mxu0 %v53
    %356 = vmatpush.bf16.msra.mxu0 %v51
    %357 = vmatpush.bf16.msra.mxu0 %v49
    %358 = vmatpush.bf16.msra.mxu0 %v47
    %359 = vmatmul.bf16.gmra.mxu0 %v336
    %v360 = vpop.f32.mrf.mxu0
    %v361 = vadd.f32 0.0, %v360
    %v362 = vpop.f32.mrf.mxu0
    %363 = vdwg.mxu0
    %v364 = vadd.f32 %v207, %v348
    %v365 = vxor.u32 %v364, 2147483648
    %v366 = vmul.f32 %v365, 1.442695
    %v367 = vpow.pop %v366
    %v368 = vadd.f32 %v367, 1.0
    %v369 = vrcp.pop %v368
    %v370 = vmul.f32 %v368, %v369
    %v371 = vsub.f32 1.0, %v370
    %v372 = vmul.f32 %v369, %v371
    %v373 = vadd.f32 %v369, %v372
    %vm374 = vweird.f32 %v368
    %vm375 = vweird.f32 %v369
    %vm376 = vmor %vm374, %vm375
    %v377 = vsel %vm376, %v369, %v373
    %v378 = vand.u32 2147483647, %v368
    %vm379 = vcmp.eq.f32.partialorder %v378, 8.507059e+37
    %v380 = vand.u32 %v368, 2147483648
    %v381 = vor.u32 1.1754944e-38, %v380
    %v382 = vsel %vm379, %v381, %v377
    %v383 = vmul.f32 1.0, %v382
    %v384 = vadd.f32 %v361, %v318
    %v385 = vmul.f32 %v383, %v384
    %v386 = vadd.f32 %v248, %v385
    %v387 = vtanh.pop %v386
    %v388 = vsub.f32 1.0, %v383
    %390 = vrot.lane.b32.xlu0 %v387, 64
    %v391 = vpop.permute.xlu0 %390
    %v393 = vmul.f32 %v388, %v391
    %v394 = vmul.f32 %v383, %v330
    %v395 = vadd.f32 %v393, %v394
    %v396 = vpack.c.bf16 %v395, %v395
    %398 = vrot.lane.b32.xlu0 %v396, 64
    %v399 = vpop.permute.xlu0 %398
    %v401 = vsel %vm268, %v399, 0
    %403 = vmatpush.bf16.msra.mxu0 0
    %404 = vmatpush.bf16.msra.mxu0 0
    %405 = vmatpush.bf16.msra.mxu0 0
    %406 = vmatpush.bf16.msra.mxu0 0
    %407 = vmatpush.bf16.msra.mxu0 %v52
    %408 = vmatpush.bf16.msra.mxu0 %v50
    %409 = vmatpush.bf16.msra.mxu0 %v48
    %410 = vmatpush.bf16.msra.mxu0 %v46
    %411 = vmatmul.bf16.gmra.mxu0 %v401
    %v412 = vpop.f32.mrf.mxu0
    %v413 = vadd.f32 0.0, %v412
    %v414 = vpop.f32.mrf.mxu0
    %415 = vdwg.mxu0
    %416 = vmatpush.bf16.msra.mxu0 0
    %417 = vmatpush.bf16.msra.mxu0 0
    %418 = vmatpush.bf16.msra.mxu0 0
    %419 = vmatpush.bf16.msra.mxu0 0
    %420 = vmatpush.bf16.msra.mxu0 %v53
    %421 = vmatpush.bf16.msra.mxu0 %v51
    %422 = vmatpush.bf16.msra.mxu0 %v49
    %423 = vmatpush.bf16.msra.mxu0 %v47
    %424 = vmatmul.bf16.gmra.mxu0 %v401
    %v425 = vpop.f32.mrf.mxu0
    %v426 = vadd.f32 0.0, %v425
    %v427 = vpop.f32.mrf.mxu0
    %428 = vdwg.mxu0
    %v429 = vadd.f32 %v210, %v413
    %v430 = vxor.u32 %v429, 2147483648
    %v431 = vmul.f32 %v430, 1.442695
    %v432 = vpow.pop %v431
    %v433 = vadd.f32 %v432, 1.0
    %v434 = vrcp.pop %v433
    %v435 = vmul.f32 %v433, %v434
    %v436 = vsub.f32 1.0, %v435
    %v437 = vmul.f32 %v434, %v436
    %v438 = vadd.f32 %v434, %v437
    %vm439 = vweird.f32 %v433
    %vm440 = vweird.f32 %v434
    %vm441 = vmor %vm439, %vm440
    %v442 = vsel %vm441, %v434, %v438
    %v443 = vand.u32 2147483647, %v433
    %vm444 = vcmp.eq.f32.partialorder %v443, 8.507059e+37
    %v445 = vand.u32 %v433, 2147483648
    %v446 = vor.u32 1.1754944e-38, %v445
    %v447 = vsel %vm444, %v446, %v442
    %v448 = vmul.f32 1.0, %v447
    %v449 = vadd.f32 %v426, %v318
    %v450 = vmul.f32 %v448, %v449
    %v451 = vadd.f32 %v251, %v450
    %v452 = vtanh.pop %v451
    %v453 = vsub.f32 1.0, %v448
    %455 = vrot.lane.b32.xlu0 %v452, 64
    %v456 = vpop.permute.xlu0 %455
    %v458 = vmul.f32 %v453, %v456
    %v459 = vmul.f32 %v448, %v395
    %v460 = vadd.f32 %v458, %v459
    %v461 = vpack.c.bf16 %v460, %v460
    %463 = vrot.lane.b32.xlu0 %v461, 64
    %v464 = vpop.permute.xlu0 %463
    %v466 = vsel %vm268, %v464, 0
    %468 = vmatpush.bf16.msra.mxu0 0
    %469 = vmatpush.bf16.msra.mxu0 0
    %470 = vmatpush.bf16.msra.mxu0 0
    %471 = vmatpush.bf16.msra.mxu0 0
    %472 = vmatpush.bf16.msra.mxu0 %v52
    %473 = vmatpush.bf16.msra.mxu0 %v50
    %474 = vmatpush.bf16.msra.mxu0 %v48
    %475 = vmatpush.bf16.msra.mxu0 %v46
    %476 = vmatmul.bf16.gmra.mxu0 %v466
    %v477 = vpop.f32.mrf.mxu0
    %v478 = vadd.f32 0.0, %v477
    %v479 = vpop.f32.mrf.mxu0
    %480 = vdwg.mxu0
    %481 = vmatpush.bf16.msra.mxu0 0
    %482 = vmatpush.bf16.msra.mxu0 0
    %483 = vmatpush.bf16.msra.mxu0 0
    %484 = vmatpush.bf16.msra.mxu0 0
    %485 = vmatpush.bf16.msra.mxu0 %v53
    %486 = vmatpush.bf16.msra.mxu0 %v51
    %487 = vmatpush.bf16.msra.mxu0 %v49
    %488 = vmatpush.bf16.msra.mxu0 %v47
    %489 = vmatmul.bf16.gmra.mxu0 %v466
    %v490 = vpop.f32.mrf.mxu0
    %v491 = vadd.f32 0.0, %v490
    %v492 = vpop.f32.mrf.mxu0
    %493 = vdwg.mxu0
    %v494 = vadd.f32 %v213, %v478
    %v495 = vxor.u32 %v494, 2147483648
    %v496 = vmul.f32 %v495, 1.442695
    %v497 = vpow.pop %v496
    %v498 = vadd.f32 %v497, 1.0
    %v499 = vrcp.pop %v498
    %v500 = vmul.f32 %v498, %v499
    %v501 = vsub.f32 1.0, %v500
    %v502 = vmul.f32 %v499, %v501
    %v503 = vadd.f32 %v499, %v502
    %vm504 = vweird.f32 %v498
    %vm505 = vweird.f32 %v499
    %vm506 = vmor %vm504, %vm505
    %v507 = vsel %vm506, %v499, %v503
    %v508 = vand.u32 2147483647, %v498
    %vm509 = vcmp.eq.f32.partialorder %v508, 8.507059e+37
    %v510 = vand.u32 %v498, 2147483648
    %v511 = vor.u32 1.1754944e-38, %v510
    %v512 = vsel %vm509, %v511, %v507
    %v513 = vmul.f32 1.0, %v512
    %v514 = vadd.f32 %v491, %v318
    %v515 = vmul.f32 %v513, %v514
    %v516 = vadd.f32 %v254, %v515
    %v517 = vtanh.pop %v516
    %v518 = vsub.f32 1.0, %v513
    %520 = vrot.lane.b32.xlu0 %v517, 64
    %v521 = vpop.permute.xlu0 %520
    %v523 = vmul.f32 %v518, %v521
    %v524 = vmul.f32 %v513, %v460
    %v525 = vadd.f32 %v523, %v524
    %v526 = vpack.c.bf16 %v525, %v525
    %528 = vrot.lane.b32.xlu0 %v526, 64
    %v529 = vpop.permute.xlu0 %528
    %v531 = vsel %vm268, %v529, 0
    %533 = vmatpush.bf16.msra.mxu0 0
    %534 = vmatpush.bf16.msra.mxu0 0
    %535 = vmatpush.bf16.msra.mxu0 0
    %536 = vmatpush.bf16.msra.mxu0 0
    %537 = vmatpush.bf16.msra.mxu0 %v52
    %538 = vmatpush.bf16.msra.mxu0 %v50
    %539 = vmatpush.bf16.msra.mxu0 %v48
    %540 = vmatpush.bf16.msra.mxu0 %v46
    %541 = vmatmul.bf16.gmra.mxu0 %v531
    %v542 = vpop.f32.mrf.mxu0
    %v543 = vadd.f32 0.0, %v542
    %v544 = vpop.f32.mrf.mxu0
    %545 = vdwg.mxu0
    %546 = vmatpush.bf16.msra.mxu0 0
    %547 = vmatpush.bf16.msra.mxu0 0
    %548 = vmatpush.bf16.msra.mxu0 0
    %549 = vmatpush.bf16.msra.mxu0 0
    %550 = vmatpush.bf16.msra.mxu0 %v53
    %551 = vmatpush.bf16.msra.mxu0 %v51
    %552 = vmatpush.bf16.msra.mxu0 %v49
    %553 = vmatpush.bf16.msra.mxu0 %v47
    %554 = vmatmul.bf16.gmra.mxu0 %v531
    %v555 = vpop.f32.mrf.mxu0
    %v556 = vadd.f32 0.0, %v555
    %v557 = vpop.f32.mrf.mxu0
    %558 = vdwg.mxu0
    %v559 = vadd.f32 %v216, %v543
    %v560 = vxor.u32 %v559, 2147483648
    %v561 = vmul.f32 %v560, 1.442695
    %v562 = vpow.pop %v561
    %v563 = vadd.f32 %v562, 1.0
    %v564 = vrcp.pop %v563
    %v565 = vmul.f32 %v563, %v564
    %v566 = vsub.f32 1.0, %v565
    %v567 = vmul.f32 %v564, %v566
    %v568 = vadd.f32 %v564, %v567
    %vm569 = vweird.f32 %v563
    %vm570 = vweird.f32 %v564
    %vm571 = vmor %vm569, %vm570
    %v572 = vsel %vm571, %v564, %v568
    %v573 = vand.u32 2147483647, %v563
    %vm574 = vcmp.eq.f32.partialorder %v573, 8.507059e+37
    %v575 = vand.u32 %v563, 2147483648
    %v576 = vor.u32 1.1754944e-38, %v575
    %v577 = vsel %vm574, %v576, %v572
    %v578 = vmul.f32 1.0, %v577
    %v579 = vadd.f32 %v556, %v318
    %v580 = vmul.f32 %v578, %v579
    %v581 = vadd.f32 %v257, %v580
    %v582 = vtanh.pop %v581
    %v583 = vsub.f32 1.0, %v578
    %585 = vrot.lane.b32.xlu0 %v582, 64
    %v586 = vpop.permute.xlu0 %585
    %v588 = vmul.f32 %v583, %v586
    %v589 = vmul.f32 %v578, %v525
    %v590 = vadd.f32 %v588, %v589
    %v591 = vpack.c.bf16 %v590, %v590
    %593 = vrot.lane.b32.xlu0 %v591, 64
    %v594 = vpop.permute.xlu0 %593
    %v596 = vsel %vm268, %v594, 0
    %598 = vmatpush.bf16.msra.mxu0 0
    %599 = vmatpush.bf16.msra.mxu0 0
    %600 = vmatpush.bf16.msra.mxu0 0
    %601 = vmatpush.bf16.msra.mxu0 0
    %602 = vmatpush.bf16.msra.mxu0 %v52
    %603 = vmatpush.bf16.msra.mxu0 %v50
    %604 = vmatpush.bf16.msra.mxu0 %v48
    %605 = vmatpush.bf16.msra.mxu0 %v46
    %606 = vmatmul.bf16.gmra.mxu0 %v596
    %v607 = vpop.f32.mrf.mxu0
    %v608 = vadd.f32 0.0, %v607
    %v609 = vpop.f32.mrf.mxu0
    %610 = vdwg.mxu0
    %611 = vmatpush.bf16.msra.mxu0 0
    %612 = vmatpush.bf16.msra.mxu0 0
    %613 = vmatpush.bf16.msra.mxu0 0
    %614 = vmatpush.bf16.msra.mxu0 0
    %615 = vmatpush.bf16.msra.mxu0 %v53
    %616 = vmatpush.bf16.msra.mxu0 %v51
    %617 = vmatpush.bf16.msra.mxu0 %v49
    %618 = vmatpush.bf16.msra.mxu0 %v47
    %619 = vmatmul.bf16.gmra.mxu0 %v596
    %v620 = vpop.f32.mrf.mxu0
    %v621 = vadd.f32 0.0, %v620
    %v622 = vpop.f32.mrf.mxu0
    %623 = vdwg.mxu0
    %v624 = vadd.f32 %v219, %v608
    %v625 = vxor.u32 %v624, 2147483648
    %v626 = vmul.f32 %v625, 1.442695
    %v627 = vpow.pop %v626
    %v628 = vadd.f32 %v627, 1.0
    %v629 = vrcp.pop %v628
    %v630 = vmul.f32 %v628, %v629
    %v631 = vsub.f32 1.0, %v630
    %v632 = vmul.f32 %v629, %v631
    %v633 = vadd.f32 %v629, %v632
    %vm634 = vweird.f32 %v628
    %vm635 = vweird.f32 %v629
    %vm636 = vmor %vm634, %vm635
    %v637 = vsel %vm636, %v629, %v633
    %v638 = vand.u32 2147483647, %v628
    %vm639 = vcmp.eq.f32.partialorder %v638, 8.507059e+37
    %v640 = vand.u32 %v628, 2147483648
    %v641 = vor.u32 1.1754944e-38, %v640
    %v642 = vsel %vm639, %v641, %v637
    %v643 = vmul.f32 1.0, %v642
    %v644 = vadd.f32 %v621, %v318
    %v645 = vmul.f32 %v643, %v644
    %v646 = vadd.f32 %v260, %v645
    %v647 = vtanh.pop %v646
    %v648 = vsub.f32 1.0, %v643
    %650 = vrot.lane.b32.xlu0 %v647, 64
    %v651 = vpop.permute.xlu0 %650
    %v653 = vmul.f32 %v648, %v651
    %v654 = vmul.f32 %v643, %v590
    %v655 = vadd.f32 %v653, %v654
    %v656 = vpack.c.bf16 %v655, %v655
    %658 = vrot.lane.b32.xlu0 %v656, 64
    %v659 = vpop.permute.xlu0 %658
    %v661 = vsel %vm268, %v659, 0
    %663 = vmatpush.bf16.msra.mxu0 0
    %664 = vmatpush.bf16.msra.mxu0 0
    %665 = vmatpush.bf16.msra.mxu0 0
    %666 = vmatpush.bf16.msra.mxu0 0
    %667 = vmatpush.bf16.msra.mxu0 %v52
    %668 = vmatpush.bf16.msra.mxu0 %v50
    %669 = vmatpush.bf16.msra.mxu0 %v48
    %670 = vmatpush.bf16.msra.mxu0 %v46
    %671 = vmatmul.bf16.gmra.mxu0 %v661
    %v672 = vpop.f32.mrf.mxu0
    %v673 = vadd.f32 0.0, %v672
    %v674 = vpop.f32.mrf.mxu0
    %675 = vdwg.mxu0
    %676 = vmatpush.bf16.msra.mxu0 0
    %677 = vmatpush.bf16.msra.mxu0 0
    %678 = vmatpush.bf16.msra.mxu0 0
    %679 = vmatpush.bf16.msra.mxu0 0
    %680 = vmatpush.bf16.msra.mxu0 %v53
    %681 = vmatpush.bf16.msra.mxu0 %v51
    %682 = vmatpush.bf16.msra.mxu0 %v49
    %683 = vmatpush.bf16.msra.mxu0 %v47
    %684 = vmatmul.bf16.gmra.mxu0 %v661
    %v685 = vpop.f32.mrf.mxu0
    %v686 = vadd.f32 0.0, %v685
    %v687 = vpop.f32.mrf.mxu0
    %688 = vdwg.mxu0
    %v689 = vadd.f32 %v222, %v673
    %v690 = vxor.u32 %v689, 2147483648
    %v691 = vmul.f32 %v690, 1.442695
    %v692 = vpow.pop %v691
    %v693 = vadd.f32 %v692, 1.0
    %v694 = vrcp.pop %v693
    %v695 = vmul.f32 %v693, %v694
    %v696 = vsub.f32 1.0, %v695
    %v697 = vmul.f32 %v694, %v696
    %v698 = vadd.f32 %v694, %v697
    %vm699 = vweird.f32 %v693
    %vm700 = vweird.f32 %v694
    %vm701 = vmor %vm699, %vm700
    %v702 = vsel %vm701, %v694, %v698
    %v703 = vand.u32 2147483647, %v693
    %vm704 = vcmp.eq.f32.partialorder %v703, 8.507059e+37
    %v705 = vand.u32 %v693, 2147483648
    %v706 = vor.u32 1.1754944e-38, %v705
    %v707 = vsel %vm704, %v706, %v702
    %v708 = vmul.f32 1.0, %v707
    %v709 = vadd.f32 %v686, %v318
    %v710 = vmul.f32 %v708, %v709
    %v711 = vadd.f32 %v263, %v710
    %v712 = vtanh.pop %v711
    %v713 = vsub.f32 1.0, %v708
    %715 = vrot.lane.b32.xlu0 %v712, 64
    %v716 = vpop.permute.xlu0 %715
    %v718 = vmul.f32 %v713, %v716
    %v719 = vmul.f32 %v708, %v655
    %v720 = vadd.f32 %v718, %v719
    %v721 = vpack.c.bf16 %v720, %v720
    %723 = vrot.lane.b32.xlu0 %v721, 64
    %v724 = vpop.permute.xlu0 %723
    %v726 = vsel %vm268, %v724, 0
    %728 = vmatpush.bf16.msra.mxu0 0
    %729 = vmatpush.bf16.msra.mxu0 0
    %730 = vmatpush.bf16.msra.mxu0 0
    %731 = vmatpush.bf16.msra.mxu0 0
    %732 = vmatpush.bf16.msra.mxu0 %v52
    %733 = vmatpush.bf16.msra.mxu0 %v50
    %734 = vmatpush.bf16.msra.mxu0 %v48
    %735 = vmatpush.bf16.msra.mxu0 %v46
    %736 = vmatmul.bf16.gmra.mxu0 %v726
    %v737 = vpop.f32.mrf.mxu0
    %v738 = vadd.f32 0.0, %v737
    %v739 = vpop.f32.mrf.mxu0
    %740 = vdwg.mxu0
    %741 = vmatpush.bf16.msra.mxu0 0
    %742 = vmatpush.bf16.msra.mxu0 0
    %743 = vmatpush.bf16.msra.mxu0 0
    %744 = vmatpush.bf16.msra.mxu0 0
    %745 = vmatpush.bf16.msra.mxu0 %v53
    %746 = vmatpush.bf16.msra.mxu0 %v51
    %747 = vmatpush.bf16.msra.mxu0 %v49
    %748 = vmatpush.bf16.msra.mxu0 %v47
    %749 = vmatmul.bf16.gmra.mxu0 %v726
    %v750 = vpop.f32.mrf.mxu0
    %v751 = vadd.f32 0.0, %v750
    %v752 = vpop.f32.mrf.mxu0
    %753 = vdwg.mxu0
    %v754 = vadd.f32 %v225, %v738
    %v755 = vxor.u32 %v754, 2147483648
    %v756 = vmul.f32 %v755, 1.442695
    %v757 = vpow.pop %v756
    %v758 = vadd.f32 %v757, 1.0
    %v759 = vrcp.pop %v758
    %v760 = vmul.f32 %v758, %v759
    %v761 = vsub.f32 1.0, %v760
    %v762 = vmul.f32 %v759, %v761
    %v763 = vadd.f32 %v759, %v762
    %vm764 = vweird.f32 %v758
    %vm765 = vweird.f32 %v759
    %vm766 = vmor %vm764, %vm765
    %v767 = vsel %vm766, %v759, %v763
    %v768 = vand.u32 2147483647, %v758
    %vm769 = vcmp.eq.f32.partialorder %v768, 8.507059e+37
    %v770 = vand.u32 %v758, 2147483648
    %v771 = vor.u32 1.1754944e-38, %v770
    %v772 = vsel %vm769, %v771, %v767
    %v773 = vmul.f32 1.0, %v772
    %v774 = vadd.f32 %v751, %v318
    %v775 = vmul.f32 %v773, %v774
    %v776 = vadd.f32 %v266, %v775
    %v777 = vtanh.pop %v776
    %v778 = vsub.f32 1.0, %v773
    %780 = vrot.lane.b32.xlu0 %v777, 64
    %v781 = vpop.permute.xlu0 %780
    %v783 = vmul.f32 %v778, %v781
    %v784 = vmul.f32 %v773, %v720
    %v785 = vadd.f32 %v783, %v784
    %v786 = vld [vmem:[#allocation2 + $0x10] sm:$0xff]
    %v787 = vld [vmem:[#allocation2 + $0x20] sm:$0xff]
    %v788 = vld [vmem:[#allocation2 + $0x30] sm:$0xff]
    %v789 = vld [vmem:[#allocation2 + $0x40] sm:$0xff]
    %v790 = vld [vmem:[#allocation2 + $0x50] sm:$0xff]
    %v791 = vld [vmem:[#allocation2 + $0x60] sm:$0xff]
    %v792 = vld [vmem:[#allocation2 + $0x70] sm:$0xff]
    %v793 = vld [vmem:[#allocation2 + $0x80] sm:$0xff]
    %795 = vrot.lane.b32.xlu0 %v330, 64
    %v796 = vpop.permute.xlu0 %795
    %799 = vrot.lane.b32.xlu0 %v785, 64
    %v800 = vpop.permute.xlu0 %799
    %vm802 = vcmask 261120
    %v803 = vsel %vm802, %v796, %v800
    %805 = vrot.lane.b32.xlu0 %v395, 64
    %v806 = vpop.permute.xlu0 %805
    %809 = vrot.lane.b32.xlu0 %v720, 64
    %v810 = vpop.permute.xlu0 %809
    %v812 = vsel %vm802, %v806, %v810
    %814 = vrot.lane.b32.xlu0 %v460, 64
    %v815 = vpop.permute.xlu0 %814
    %818 = vrot.lane.b32.xlu0 %v655, 64
    %v819 = vpop.permute.xlu0 %818
    %v821 = vsel %vm802, %v815, %v819
    %823 = vrot.lane.b32.xlu0 %v525, 64
    %v824 = vpop.permute.xlu0 %823
    %827 = vrot.lane.b32.xlu0 %v590, 64
    %v828 = vpop.permute.xlu0 %827
    %v830 = vsel %vm802, %v824, %v828
    %v831 = vsel %vm802, %v828, %v824
    %v832 = vsel %vm802, %v819, %v815
    %v833 = vsel %vm802, %v810, %v806
    %v834 = vsel %vm802, %v800, %v796
    %v835 = vtanh.pop %v803
    %837 = vrot.lane.b32.xlu0 %v318, 64
    %v838 = vpop.permute.xlu0 %837
    %v840 = vmul.f32 %v835, %v838
    %v841 = vsel %vm268, %v840, 0.0
    %842 = vadd.xlane.f32.xlu0 %v841
    %v843 = vpop.xlane.xlu0 %842
    %v844 = vtanh.pop %v812
    %v845 = vmul.f32 %v844, %v838
    %v846 = vsel %vm268, %v845, 0.0
    %847 = vadd.xlane.f32.xlu0 %v846
    %v848 = vpop.xlane.xlu0 %847
    %v849 = vtanh.pop %v821
    %v850 = vmul.f32 %v849, %v838
    %v851 = vsel %vm268, %v850, 0.0
    %852 = vadd.xlane.f32.xlu0 %v851
    %v853 = vpop.xlane.xlu0 %852
    %v854 = vtanh.pop %v830
    %v855 = vmul.f32 %v854, %v838
    %v856 = vsel %vm268, %v855, 0.0
    %857 = vadd.xlane.f32.xlu0 %v856
    %v858 = vpop.xlane.xlu0 %857
    %v859 = vtanh.pop %v831
    %v860 = vmul.f32 %v859, %v838
    %v861 = vsel %vm268, %v860, 0.0
    %862 = vadd.xlane.f32.xlu0 %v861
    %v863 = vpop.xlane.xlu0 %862
    %v864 = vtanh.pop %v832
    %v865 = vmul.f32 %v864, %v838
    %v866 = vsel %vm268, %v865, 0.0
    %867 = vadd.xlane.f32.xlu0 %v866
    %v868 = vpop.xlane.xlu0 %867
    %v869 = vtanh.pop %v833
    %v870 = vmul.f32 %v869, %v838
    %v871 = vsel %vm268, %v870, 0.0
    %872 = vadd.xlane.f32.xlu0 %v871
    %v873 = vpop.xlane.xlu0 %872
    %v874 = vtanh.pop %v834
    %v875 = vmul.f32 %v874, %v838
    %v876 = vsel %vm268, %v875, 0.0
    %877 = vadd.xlane.f32.xlu0 %v876
    %v878 = vpop.xlane.xlu0 %877
    %vm879 = vcmask 7168
    %v880 = vsel %vm879, %v843, %v848
    %vm881 = vcmask 15360
    %v882 = vsel %vm881, %v880, %v853
    %vm883 = vcmask 23552
    %v884 = vsel %vm883, %v882, %v858
    %vm885 = vcmask 31744
    %v886 = vsel %vm885, %v884, %v863
    %vm887 = vcmask 39936
    %v888 = vsel %vm887, %v886, %v868
    %vm889 = vcmask 48128
    %v890 = vsel %vm889, %v888, %v873
    %vm891 = vcmask 56320
    %v892 = vsel %vm891, %v890, %v878
    %vm893 = vcmask 64512
    %v894 = vsel %vm893, %v892, -inf
    %895 = vmax.xlane.f32.xlu0 %v894
    %v896 = vpop.xlane.xlu0 %895
    %v897 = vsub.f32 %v892, %v896
    %v898 = vmul.f32 %v897, 1.442695
    %v899 = vpow.pop %v898
    %v900 = vsel %vm893, %v899, 0.0
    %901 = vadd.xlane.f32.xlu0 %v900
    %v902 = vpop.xlane.xlu0 %901
    %v903 = vrcp.pop %v902
    %v904 = vmul.f32 %v902, %v903
    %v905 = vsub.f32 1.0, %v904
    %v906 = vmul.f32 %v903, %v905
    %v907 = vadd.f32 %v903, %v906
    %vm908 = vweird.f32 %v902
    %vm909 = vweird.f32 %v903
    %vm910 = vmor %vm908, %vm909
    %v911 = vsel %vm910, %v903, %v907
    %v912 = vand.u32 2147483647, %v902
    %vm913 = vcmp.eq.f32.partialorder %v912, 8.507059e+37
    %v914 = vand.u32 %v902, 2147483648
    %v915 = vor.u32 1.1754944e-38, %v914
    %v916 = vsel %vm913, %v915, %v911
    %v917 = vmul.f32 %v899, %v916
    %919 = vset.pattern.permute.xlu0 0
    %920 = vperm.xlu0 %919, %v917
    %v921 = vpop.permute.xlu0 %920
    %v923 = vmul.f32 %v803, %v921
    %924 = vset.pattern.permute.xlu0 1
    %925 = vperm.xlu0 %924, %v917
    %v926 = vpop.permute.xlu0 %925
    %v928 = vmul.f32 %v812, %v926
    %v929 = vadd.f32 %v923, %v928
    %930 = vset.pattern.permute.xlu0 2
    %931 = vperm.xlu0 %930, %v917
    %v932 = vpop.permute.xlu0 %931
    %v934 = vmul.f32 %v821, %v932
    %v935 = vadd.f32 %v929, %v934
    %936 = vset.pattern.permute.xlu0 3
    %937 = vperm.xlu0 %936, %v917
    %v938 = vpop.permute.xlu0 %937
    %v940 = vmul.f32 %v830, %v938
    %v941 = vadd.f32 %v935, %v940
    %942 = vset.pattern.permute.xlu0 4
    %943 = vperm.xlu0 %942, %v917
    %v944 = vpop.permute.xlu0 %943
    %v946 = vmul.f32 %v831, %v944
    %v947 = vadd.f32 %v941, %v946
    %948 = vset.pattern.permute.xlu0 5
    %949 = vperm.xlu0 %948, %v917
    %v950 = vpop.permute.xlu0 %949
    %v952 = vmul.f32 %v832, %v950
    %v953 = vadd.f32 %v947, %v952
    %954 = vset.pattern.permute.xlu0 6
    %955 = vperm.xlu0 %954, %v917
    %v956 = vpop.permute.xlu0 %955
    %v958 = vmul.f32 %v833, %v956
    %v959 = vadd.f32 %v953, %v958
    %960 = vset.pattern.permute.xlu0 7
    %961 = vperm.xlu0 %960, %v917
    %v962 = vpop.permute.xlu0 %961
    %v964 = vmul.f32 %v834, %v962
    %v965 = vadd.f32 %v959, %v964
    %v966 = vtanh.pop %v965
    %v967 = vperm.slane %v29, 1
    %v969 = vsel %vm268, %v966, 0
    %971 = vmatpush.msra.mxu0 0.0
    %972 = vmatpush.msra.mxu0 0.0
    %973 = vmatpush.msra.mxu0 0.0
    %974 = vmatpush.msra.mxu0 0.0
    %975 = vmatpush.msra.mxu0 0.0
    %976 = vmatpush.msra.mxu0 0.0
    %977 = vmatpush.msra.mxu0 0.0
    %978 = vmatpush.msra.mxu0 0.0
    %979 = vmatpush.msra.mxu0 %v793
    %980 = vmatpush.msra.mxu0 %v792
    %981 = vmatpush.msra.mxu0 %v791
    %982 = vmatpush.msra.mxu0 %v790
    %983 = vmatpush.msra.mxu0 %v789
    %984 = vmatpush.msra.mxu0 %v788
    %985 = vmatpush.msra.mxu0 %v787
    %986 = vmatpush.msra.mxu0 %v786
    %987 = vmatmul.f32.gmra.mxu0 %v969
    %v988 = vpop.f32.mrf.mxu0
    %v989 = vadd.f32 %v967, %v988
    %990 = vdwg.mxu0
    %991 = vst.msk [vmem:[%s2] sm:$0xff] %vm893, %v989
    // Predicated region
    $region14: #{attention_rnn_forward.1} parent=1 // pred_check
      _
    $region15: #{attention_rnn_forward.1} parent=1 // pred_check_branch
      %993 = sbr.rel (0) target = $region17
    $region16: #{attention_rnn_forward.1} parent=1 // pred_region
      _
    $region17: #{attention_rnn_forward.1} parent=1 // pred_fallthru
      _
    // Predicated region
    $region18: #{attention_rnn_forward.1} parent=1 // pred_check
      _
    $region19: #{attention_rnn_forward.1} parent=1 // pred_check_branch
      %995 = sbr.rel (0) target = $region21
    $region20: #{attention_rnn_forward.1} parent=1 // pred_region
      _
    $region21: #{attention_rnn_forward.1} parent=1 // pred_fallthru
      _
    %996 = vsyncpa [#allocation3], 1

</llo_original>
